<compile_context>
chip_gen: v7x
topology: tpu7x:2x2x1
jax: 0.10.0
libtpu: 0.0.40
codegen_flags: <defaults>
</compile_context>

<pallas_src>
import jax
import jax.numpy as jnp
from jax import lax
from jax.experimental import pallas as pl
from jax.experimental.pallas import tpu as pltpu

_VMEM_LIMIT = 64 * 1024 * 1024   # raise scoped VMEM (v5e default is 16 MiB)


# ------------------------------ helpers ---------------------------------- #

def _round_up(x, m):
    return ((x + m - 1) // m) * m


def _time_chunk(T, per_step_bytes, budget_bytes=8 << 20, max_chunk=256):
    """Largest multiple-of-8 divisor of T (or T itself when small) whose
    double-buffered per-chunk footprint stays under `budget_bytes`."""
    cap = min(max_chunk, max(8, budget_bytes // max(2 * per_step_bytes, 1)))
    if T <= cap:
        return T
    for c in range(min(cap, T), 7, -1):
        if T % c == 0 and c % 8 == 0:
            return c
    return T   # caller pads T to a multiple of 8, so rarely hit


def _vocab_chunk(V_pad, max_chunk=2048):
    """Multiple-of-128 divisor of V_pad, capped at max_chunk."""
    m = V_pad // 128
    for g in range(min(m, max_chunk // 128), 0, -1):
        if m % g == 0:
            return 128 * g
    return V_pad


def _pick_unroll(Tc):
    if Tc % 8 == 0:
        return 8
    if Tc <= 16:
        return True
    return 1


# ------------------------------ kernels ---------------------------------- #

def _gru_recurrence_kernel(xproj_ref, start_ref, whrz_ref, whh_ref,
                           hidden_ref, h_scratch):
    """One grid step = Tc GRU time steps for one batch chunk.

    xproj_ref : (Tc, Bc, 3H)  precomputed x_t @ [Wxr|Wxz|Wxh] + [br|bz|bh]
    whrz_ref  : (H, 2H)       fused hidden-side weights for r and z gates
    whh_ref   : (H, H)        hidden-side weight for hbar (uses r*h)
    hidden_ref: (Tc, Bc, H)   per-step hidden states (time-major)
    h_scratch : (Bc, H)       hidden state carried across time-chunk steps
    """
    t_chunk = pl.program_id(1)

    @pl.when(t_chunk == 0)   # new batch chunk -> restart from `start`
    def _init():
        h_scratch[...] = jnp.broadcast_to(start_ref[...], h_scratch.shape)

    H = h_scratch.shape[1]
    Tc = xproj_ref.shape[0]
    # Hoist weight loads out of the inner loop (constant index_map blocks).
    whrz = whrz_ref[...]
    whh = whh_ref[...]

    def step(i, h):
        xp = xproj_ref[i]                                            # (Bc, 3H)
        rz = jnp.dot(h, whrz, preferred_element_type=jnp.float32)    # (Bc, 2H)
        # H is a multiple of 128, so these slices are lane-aligned (free).
        r = jax.nn.sigmoid(xp[:, 0:H] + rz[:, 0:H])
        z = jax.nn.sigmoid(xp[:, H:2 * H] + rz[:, H:2 * H])
        hbar = jnp.tanh(xp[:, 2 * H:3 * H]
                        + jnp.dot(r * h, whh,
                                  preferred_element_type=jnp.float32))
        ht = (1.0 - z) * h + z * hbar
        hidden_ref[i] = ht.astype(hidden_ref.dtype)
        return ht

    h_scratch[...] = lax.fori_loop(0, Tc, step, h_scratch[...],
                                   unroll=_pick_unroll(Tc))


def _rnn_recurrence_kernel(xproj_ref, start_ref, whh_ref, hidden_ref, h_scratch):
    """One grid step = Tc vanilla-RNN time steps (bias folded into xproj)."""
    t_chunk = pl.program_id(1)

    @pl.when(t_chunk == 0)
    def _init():
        h_scratch[...] = jnp.broadcast_to(start_ref[...], h_scratch.shape)

    Tc = xproj_ref.shape[0]
    whh = whh_ref[...]

    def step(i, h):
        xp = xproj_ref[i]                                            # (Bc, H)
        ht = jnp.tanh(xp + jnp.dot(h, whh, preferred_element_type=jnp.float32))
        hidden_ref[i] = ht.astype(hidden_ref.dtype)
        return ht

    h_scratch[...] = lax.fori_loop(0, Tc, step, h_scratch[...],
                                   unroll=_pick_unroll(Tc))


def _lm_head_kernel(h_ref, wlm_ref, blm_ref, logits_ref):
    """(Tt, H) hidden block x (H, Vt) weight block -> (Tt, Vt) logits block."""
    logits_ref[...] = (jnp.dot(h_ref[...], wlm_ref[...],
                               preferred_element_type=jnp.float32)
                       + blm_ref[...]).astype(logits_ref.dtype)


# ------------------------------ wrapper ----------------------------------- #

def rnn_forward(idx, params, cell_type, rec_time_chunk=None, batch_chunks=1,
                hidden_dtype=jnp.float32):
    """Equivalent of RNN.forward(idx, targets=None) -> (logits, None).

    batch_chunks > 1 adds a leading 'parallel' grid axis over batch chunks in
    the recurrence (feeds v7x's second TensorCore).  hidden_dtype=bf16 halves
    the hidden HBM round trip and doubles MXU rate in the lm_head on v6e/v7x
    (the recurrent fp32 carry itself is unchanged).
    """
    wte = params["wte"]          # (V, E)
    start = params["start"]      # (1, H)
    B, T = idx.shape
    V, E = wte.shape
    H = start.shape[1]

    # --- padded sizes: (8, 128) granularity so all stores are unmasked ----- #
    H_pad = _round_up(H, 128)
    V_pad = _round_up(V, 128)
    B_pad = _round_up(B, 8 * batch_chunks)
    T_pad = _round_up(T, 8)
    Bc = B_pad // batch_chunks

    def pad2(x, rows, cols):
        return jnp.pad(x, ((0, rows - x.shape[0]), (0, cols - x.shape[1])))

    start_p = pad2(start, 1, H_pad)

    if cell_type == "gru":
        wx_cat = jnp.concatenate([pad2(params["wxr"], E, H_pad),
                                  pad2(params["wxz"], E, H_pad),
                                  pad2(params["wxh"], E, H_pad)], axis=1)   # (E, 3H)
        bx_cat = jnp.concatenate([pad2(params["br"], 1, H_pad),
                                  pad2(params["bz"], 1, H_pad),
                                  pad2(params["bh"], 1, H_pad)], axis=1)    # (1, 3H)
        whrz = jnp.concatenate([pad2(params["whr"], H_pad, H_pad),
                                pad2(params["whz"], H_pad, H_pad)], axis=1)  # (H, 2H)
        rec_kernel = _gru_recurrence_kernel
        rec_weights = [whrz, pad2(params["whh"], H_pad, H_pad)]
    elif cell_type == "rnn":
        wx_cat = pad2(params["wxh"], E, H_pad)                               # (E, H)
        bx_cat = pad2(params["bh"], 1, H_pad)                                # (1, H)
        rec_kernel = _rnn_recurrence_kernel
        rec_weights = [pad2(params["whh"], H_pad, H_pad)]
    else:
        raise ValueError(cell_type)

    G = wx_cat.shape[1]

    # --- phase 0/1: hoist x-side projections off the serial path ----------- #
    idx_p = jnp.pad(idx, ((0, B_pad - B), (0, T_pad - T)))
    if B * T >= V:
        # x_t is an embedding row -> fold embedding + projection into a table.
        proj_table = jnp.dot(wte, wx_cat,
                             preferred_element_type=jnp.float32) + bx_cat   # (V, G)
        xproj_t = jnp.take(proj_table, idx_p.T, axis=0)                     # (T,B,G)
    else:
        emb_t = jnp.take(wte, idx_p.T, axis=0)                              # (T,B,E)
        xproj_t = jnp.einsum("tbe,eg->tbg", emb_t, wx_cat,
                             preferred_element_type=jnp.float32) + bx_cat

    # --- phase 2: sequential recurrence over time chunks ------------------- #
    Tc = (rec_time_chunk if rec_time_chunk is not None
          else _time_chunk(T_pad, per_step_bytes=Bc * (G + H_pad) * 4))
    assert T_pad % Tc == 0

    def const_spec(x):
        zeros = (0,) * x.ndim
        return pl.BlockSpec(x.shape, lambda b, c: zeros)

    hidden_t = pl.pallas_call(
        rec_kernel,
        out_shape=jax.ShapeDtypeStruct((T_pad, B_pad, H_pad), hidden_dtype),
        grid_spec=pltpu.PrefetchScalarGridSpec(
            num_scalar_prefetch=0,
            grid=(batch_chunks, T_pad // Tc),
            in_specs=[pl.BlockSpec((Tc, Bc, G), lambda b, c: (c, b, 0)),
                      const_spec(start_p)]
                     + [const_spec(w) for w in rec_weights],
            out_specs=pl.BlockSpec((Tc, Bc, H_pad), lambda b, c: (c, b, 0)),
            scratch_shapes=[pltpu.VMEM((Bc, H_pad), jnp.float32)]),
        compiler_params=pltpu.CompilerParams(
            dimension_semantics=("parallel", "arbitrary"),
            vmem_limit_bytes=_VMEM_LIMIT),
    )(xproj_t, start_p, *rec_weights)

    # --- phase 3: lm_head, fully parallel (B, T-tile, V-tile) grid --------- #
    wlm_p = pad2(params["wlm"], H_pad, V_pad).astype(hidden_dtype)
    blm_p = pad2(params["blm"], 1, V_pad)
    Tt = _time_chunk(T_pad, per_step_bytes=(H_pad + V_pad) * 4, max_chunk=128)
    Vt = _vocab_chunk(V_pad)

    logits_full = pl.pallas_call(
        _lm_head_kernel,
        out_shape=jax.ShapeDtypeStruct((B_pad, T_pad, V_pad), jnp.float32),
        grid_spec=pltpu.PrefetchScalarGridSpec(
            num_scalar_prefetch=0,
            grid=(B_pad, T_pad // Tt, V_pad // Vt),
            in_specs=[pl.BlockSpec((Tt, None, H_pad), lambda b, i, j: (i, b, 0)),
                      pl.BlockSpec((H_pad, Vt), lambda b, i, j: (0, j)),
                      pl.BlockSpec((1, Vt), lambda b, i, j: (0, j))],
            out_specs=pl.BlockSpec((None, Tt, Vt), lambda b, i, j: (b, i, j)),
            scratch_shapes=[]),
        compiler_params=pltpu.CompilerParams(
            dimension_semantics=("parallel", "parallel", "parallel"),
            vmem_limit_bytes=_VMEM_LIMIT),
    )(hidden_t, wlm_p, blm_p)

    logits = logits_full[:B, :T, :V]
    # TODO(synk): targets / cross-entropy loss branch not needed (targets=None).
    return logits, None


# ------------------------ parameter construction ------------------------- #

def init_params(key, cell_type, n_embd, n_embd2, vocab_size):
    """Deterministic init mirroring the PyTorch module's parameter shapes."""
    ks = jax.random.split(key, 8)
    E, H, V = n_embd, n_embd2, vocab_size

    def linear(k, fan_in, fan_out):
        kw, kb = jax.random.split(k)
        bound = 1.0 / jnp.sqrt(fan_in)
        w = jax.random.uniform(kw, (fan_out, fan_in), jnp.float32, -bound, bound)
        b = jax.random.uniform(kb, (fan_out,), jnp.float32, -bound, bound)
        return w, b

    params = {
        "wte": jax.random.normal(ks[0], (V, E), jnp.float32),
        "start": jnp.zeros((1, H), jnp.float32),
    }

    if cell_type == "gru":
        wz, bz = linear(ks[1], E + H, H)   # xh_to_z
        wr, br = linear(ks[2], E + H, H)   # xh_to_r
        wh, bh = linear(ks[3], E + H, H)   # xh_to_hbar
        params.update({
            "wxz": wz[:, :E].T, "whz": wz[:, E:].T, "bz": bz.reshape(1, H),
            "wxr": wr[:, :E].T, "whr": wr[:, E:].T, "br": br.reshape(1, H),
            "wxh": wh[:, :E].T, "whh": wh[:, E:].T, "bh": bh.reshape(1, H),
        })
    else:
        wh, bh = linear(ks[3], E + H, H)   # xh_to_h
        params.update({
            "wxh": wh[:, :E].T, "whh": wh[:, E:].T, "bh": bh.reshape(1, H),
        })

    wlm, blm = linear(ks[4], H, V)         # lm_head
    params["wlm"] = wlm.T                  # (H, V)
    params["blm"] = blm.reshape(1, V)
    return params


# --------------------------- pure-JAX reference --------------------------- #

def reference_forward(idx, params, cell_type):
    wte, start = params["wte"], params["start"]
    B, T = idx.shape
    H = start.shape[1]
    emb = jnp.take(wte, idx, axis=0)
    h = jnp.broadcast_to(start, (B, H))
    hs = []
    for i in range(T):
        xt = emb[:, i, :]
        if cell_type == "gru":
            r = jax.nn.sigmoid(xt @ params["wxr"] + h @ params["whr"] + params["br"])
            hbar = jnp.tanh(xt @ params["wxh"] + (r * h) @ params["whh"] + params["bh"])
            z = jax.nn.sigmoid(xt @ params["wxz"] + h @ params["whz"] + params["bz"])
            h = (1.0 - z) * h + z * hbar
        else:
            h = jnp.tanh(xt @ params["wxh"] + h @ params["whh"] + params["bh"])
        hs.append(h)
    hidden = jnp.stack(hs, 1)
    return hidden @ params["wlm"] + params["blm"]


# --------------------------------- main ----------------------------------- #

if __name__ == "__main__":
    B, T = 2, 8                 # batch, block_size (sequence length)
    n_embd, n_embd2 = 16, 32
    vocab_size = 32

    key = jax.random.PRNGKey(0)
    k_idx, k_par = jax.random.split(key)
    idx = jax.random.randint(k_idx, (B, T), 0, vocab_size, dtype=jnp.int32)

    ok = True
    for cell_type in ("gru", "rnn"):
        params = init_params(k_par, cell_type, n_embd, n_embd2, vocab_size)
        ref = reference_forward(idx, params, cell_type)
        # (chunk=None, nb=1): whole sequence in one grid step.
        # (chunk=4,  nb=1): exercises the cross-grid-step hidden-state carry.
        # (chunk=None, nb=2): exercises the parallel batch-chunk axis.
        for chunk, nb in ((None, 1), (4, 1), (None, 2)):
            logits, loss = rnn_forward(idx, params, cell_type,
                                       rec_time_chunk=chunk, batch_chunks=nb)
            logits = jax.block_until_ready(logits)
            if logits.shape != (B, T, vocab_size):
                ok = False
            if not jnp.allclose(logits, ref, rtol=1e-4, atol=1e-4):
                ok = False

    if ok:
        print("KERNEL_OK")
</pallas_src>

<mosaic_0001>
module attributes {stable_mosaic.version = 11 : i64} {
  func.func @_gru_recurrence_kernel(%arg0: i32, %arg1: i32, %arg2: memref<8x8x384xf32, #tpu.memory_space<vmem>>, %arg3: memref<1x128xf32, #tpu.memory_space<vmem>>, %arg4: memref<128x256xf32, #tpu.memory_space<vmem>>, %arg5: memref<128x128xf32, #tpu.memory_space<vmem>>, %arg6: memref<8x8x128xf32, #tpu.memory_space<vmem>>, %arg7: memref<8x128xf32, #tpu.memory_space<vmem>>) attributes {dimension_semantics = [#tpu.dimension_semantics<parallel>, #tpu.dimension_semantics<arbitrary>], iteration_bounds = array<i64: 1, 1>, scalar_prefetch = 0 : i64, scratch_operands = 1 : i64, tpu.core_type = #tpu.core_type<tc>, window_params = [{transform_indices = @transform_0, window_bounds = array<i64: 8, 8, 384>}, {pipeline_mode = #tpu.pipeline_mode<synchronous>, transform_indices = @transform_1, window_bounds = array<i64: 1, 128>}, {pipeline_mode = #tpu.pipeline_mode<synchronous>, transform_indices = @transform_2, window_bounds = array<i64: 128, 256>}, {pipeline_mode = #tpu.pipeline_mode<synchronous>, transform_indices = @transform_3, window_bounds = array<i64: 128, 128>}, {transform_indices = @transform_4, window_bounds = array<i64: 8, 8, 128>}]} {
    %c0_i32 = arith.constant 0 : i32
    %0 = arith.cmpi eq, %arg1, %c0_i32 : i32
    %1 = arith.extui %0 : i1 to i32
    %c0_i32_0 = arith.constant 0 : i32
    %2 = arith.cmpi ne, %1, %c0_i32_0 : i32
    scf.if %2 {
      %c0_80 = arith.constant 0 : index
      %c0_81 = arith.constant 0 : index
      %279 = vector.load %arg3[%c0_80, %c0_81] : memref<1x128xf32, #tpu.memory_space<vmem>>, vector<1x128xf32>
      %280 = vector.shape_cast %279 : vector<1x128xf32> to vector<1x128xf32>
      %281 = vector.broadcast %280 : vector<1x128xf32> to vector<8x128xf32>
      %c0_82 = arith.constant 0 : index
      %c0_83 = arith.constant 0 : index
      %282 = vector.load %arg7[%c0_82, %c0_83] : memref<8x128xf32, #tpu.memory_space<vmem>>, vector<8x128xf32>
      tpu.vector_store %arg7[%c0_82, %c0_83], %281 {strides = array<i32>} : memref<8x128xf32, #tpu.memory_space<vmem>>, vector<8x128xf32>,
    } else {
    }
    %c0 = arith.constant 0 : index
    %c0_1 = arith.constant 0 : index
    %3 = vector.load %arg4[%c0, %c0_1] : memref<128x256xf32, #tpu.memory_space<vmem>>, vector<128x256xf32>
    %c0_2 = arith.constant 0 : index
    %c0_3 = arith.constant 0 : index
    %4 = vector.load %arg5[%c0_2, %c0_3] : memref<128x128xf32, #tpu.memory_space<vmem>>, vector<128x128xf32>
    %c0_4 = arith.constant 0 : index
    %c0_5 = arith.constant 0 : index
    %5 = vector.load %arg7[%c0_4, %c0_5] : memref<8x128xf32, #tpu.memory_space<vmem>>, vector<8x128xf32>
    %c0_i32_6 = arith.constant 0 : i32
    %6 = arith.index_cast %c0_i32_6 : i32 to index
    %c0_7 = arith.constant 0 : index
    %c0_8 = arith.constant 0 : index
    %7 = vector.load %arg2[%6, %c0_7, %c0_8] : memref<8x8x384xf32, #tpu.memory_space<vmem>>, vector<1x8x384xf32>
    %8 = vector.shape_cast %7 : vector<1x8x384xf32> to vector<8x384xf32>
    %cst = arith.constant dense<0.000000e+00> : vector<8x256xf32>
    %9 = tpu.matmul %5, %3, %cst {dimension_numbers = #tpu.dot_dimension_numbers<[1], [0], [0], [1], [0, 0, 1, 1], [], []>} : vector<8x128xf32>, vector<128x256xf32>, vector<8x256xf32> -> vector<8x256xf32>
    %10 = vector.extract_strided_slice %8 {offsets = [0, 0], sizes = [8, 128], strides = [1, 1]} : vector<8x384xf32> to vector<8x128xf32>
    %11 = vector.extract_strided_slice %9 {offsets = [0, 0], sizes = [8, 128], strides = [1, 1]} : vector<8x256xf32> to vector<8x128xf32>
    %12 = arith.addf %10, %11 : vector<8x128xf32>
    %13 = arith.negf %12 : vector<8x128xf32>
    %14 = math.exp %13 : vector<8x128xf32>
    %cst_9 = arith.constant 1.000000e+00 : f32
    %15 = vector.broadcast %cst_9 : f32 to vector<8x128xf32>
    %16 = arith.addf %15, %14 : vector<8x128xf32>
    %17 = arith.divf %15, %16 : vector<8x128xf32>
    %18 = vector.extract_strided_slice %8 {offsets = [0, 128], sizes = [8, 128], strides = [1, 1]} : vector<8x384xf32> to vector<8x128xf32>
    %19 = vector.extract_strided_slice %9 {offsets = [0, 128], sizes = [8, 128], strides = [1, 1]} : vector<8x256xf32> to vector<8x128xf32>
    %20 = arith.addf %18, %19 : vector<8x128xf32>
    %21 = arith.negf %20 : vector<8x128xf32>
    %22 = math.exp %21 : vector<8x128xf32>
    %cst_10 = arith.constant 1.000000e+00 : f32
    %23 = vector.broadcast %cst_10 : f32 to vector<8x128xf32>
    %24 = arith.addf %23, %22 : vector<8x128xf32>
    %25 = arith.divf %23, %24 : vector<8x128xf32>
    %26 = vector.extract_strided_slice %8 {offsets = [0, 256], sizes = [8, 128], strides = [1, 1]} : vector<8x384xf32> to vector<8x128xf32>
    %27 = arith.mulf %17, %5 : vector<8x128xf32>
    %cst_11 = arith.constant dense<0.000000e+00> : vector<8x128xf32>
    %28 = tpu.matmul %27, %4, %cst_11 {dimension_numbers = #tpu.dot_dimension_numbers<[1], [0], [0], [1], [0, 0, 1, 1], [], []>} : vector<8x128xf32>, vector<128x128xf32>, vector<8x128xf32> -> vector<8x128xf32>
    %29 = arith.addf %26, %28 : vector<8x128xf32>
    %30 = math.tanh %29 : vector<8x128xf32>
    %cst_12 = arith.constant 1.000000e+00 : f32
    %31 = vector.broadcast %cst_12 : f32 to vector<8x128xf32>
    %32 = arith.subf %31, %25 : vector<8x128xf32>
    %33 = arith.mulf %32, %5 : vector<8x128xf32>
    %34 = arith.mulf %25, %30 : vector<8x128xf32>
    %35 = arith.addf %33, %34 : vector<8x128xf32>
    %36 = arith.index_cast %c0_i32_6 : i32 to index
    %c0_13 = arith.constant 0 : index
    %c0_14 = arith.constant 0 : index
    %37 = vector.load %arg6[%36, %c0_13, %c0_14] : memref<8x8x128xf32, #tpu.memory_space<vmem>>, vector<1x8x128xf32>
    %38 = vector.shape_cast %37 : vector<1x8x128xf32> to vector<8x128xf32>
    %39 = vector.shape_cast %35 : vector<8x128xf32> to vector<1x8x128xf32>
    tpu.vector_store %arg6[%36, %c0_13, %c0_14], %39 {strides = array<i32>} : memref<8x8x128xf32, #tpu.memory_space<vmem>>, vector<1x8x128xf32>,
    %c1_i32 = arith.constant 1 : i32
    %40 = arith.index_cast %c1_i32 : i32 to index
    %c0_15 = arith.constant 0 : index
    %c0_16 = arith.constant 0 : index
    %41 = vector.load %arg2[%40, %c0_15, %c0_16] : memref<8x8x384xf32, #tpu.memory_space<vmem>>, vector<1x8x384xf32>
    %42 = vector.shape_cast %41 : vector<1x8x384xf32> to vector<8x384xf32>
    %cst_17 = arith.constant dense<0.000000e+00> : vector<8x256xf32>
    %43 = tpu.matmul %35, %3, %cst_17 {dimension_numbers = #tpu.dot_dimension_numbers<[1], [0], [0], [1], [0, 0, 1, 1], [], []>} : vector<8x128xf32>, vector<128x256xf32>, vector<8x256xf32> -> vector<8x256xf32>
    %44 = vector.extract_strided_slice %42 {offsets = [0, 0], sizes = [8, 128], strides = [1, 1]} : vector<8x384xf32> to vector<8x128xf32>
    %45 = vector.extract_strided_slice %43 {offsets = [0, 0], sizes = [8, 128], strides = [1, 1]} : vector<8x256xf32> to vector<8x128xf32>
    %46 = arith.addf %44, %45 : vector<8x128xf32>
    %47 = arith.negf %46 : vector<8x128xf32>
    %48 = math.exp %47 : vector<8x128xf32>
    %cst_18 = arith.constant 1.000000e+00 : f32
    %49 = vector.broadcast %cst_18 : f32 to vector<8x128xf32>
    %50 = arith.addf %49, %48 : vector<8x128xf32>
    %51 = arith.divf %49, %50 : vector<8x128xf32>
    %52 = vector.extract_strided_slice %42 {offsets = [0, 128], sizes = [8, 128], strides = [1, 1]} : vector<8x384xf32> to vector<8x128xf32>
    %53 = vector.extract_strided_slice %43 {offsets = [0, 128], sizes = [8, 128], strides = [1, 1]} : vector<8x256xf32> to vector<8x128xf32>
    %54 = arith.addf %52, %53 : vector<8x128xf32>
    %55 = arith.negf %54 : vector<8x128xf32>
    %56 = math.exp %55 : vector<8x128xf32>
    %cst_19 = arith.constant 1.000000e+00 : f32
    %57 = vector.broadcast %cst_19 : f32 to vector<8x128xf32>
    %58 = arith.addf %57, %56 : vector<8x128xf32>
    %59 = arith.divf %57, %58 : vector<8x128xf32>
    %60 = vector.extract_strided_slice %42 {offsets = [0, 256], sizes = [8, 128], strides = [1, 1]} : vector<8x384xf32> to vector<8x128xf32>
    %61 = arith.mulf %51, %35 : vector<8x128xf32>
    %cst_20 = arith.constant dense<0.000000e+00> : vector<8x128xf32>
    %62 = tpu.matmul %61, %4, %cst_20 {dimension_numbers = #tpu.dot_dimension_numbers<[1], [0], [0], [1], [0, 0, 1, 1], [], []>} : vector<8x128xf32>, vector<128x128xf32>, vector<8x128xf32> -> vector<8x128xf32>
    %63 = arith.addf %60, %62 : vector<8x128xf32>
    %64 = math.tanh %63 : vector<8x128xf32>
    %cst_21 = arith.constant 1.000000e+00 : f32
    %65 = vector.broadcast %cst_21 : f32 to vector<8x128xf32>
    %66 = arith.subf %65, %59 : vector<8x128xf32>
    %67 = arith.mulf %66, %35 : vector<8x128xf32>
    %68 = arith.mulf %59, %64 : vector<8x128xf32>
    %69 = arith.addf %67, %68 : vector<8x128xf32>
    %70 = arith.index_cast %c1_i32 : i32 to index
    %c0_22 = arith.constant 0 : index
    %c0_23 = arith.constant 0 : index
    %71 = vector.load %arg6[%70, %c0_22, %c0_23] : memref<8x8x128xf32, #tpu.memory_space<vmem>>, vector<1x8x128xf32>
    %72 = vector.shape_cast %71 : vector<1x8x128xf32> to vector<8x128xf32>
    %73 = vector.shape_cast %69 : vector<8x128xf32> to vector<1x8x128xf32>
    tpu.vector_store %arg6[%70, %c0_22, %c0_23], %73 {strides = array<i32>} : memref<8x8x128xf32, #tpu.memory_space<vmem>>, vector<1x8x128xf32>,
    %c2_i32 = arith.constant 2 : i32
    %74 = arith.index_cast %c2_i32 : i32 to index
    %c0_24 = arith.constant 0 : index
    %c0_25 = arith.constant 0 : index
    %75 = vector.load %arg2[%74, %c0_24, %c0_25] : memref<8x8x384xf32, #tpu.memory_space<vmem>>, vector<1x8x384xf32>
    %76 = vector.shape_cast %75 : vector<1x8x384xf32> to vector<8x384xf32>
    %cst_26 = arith.constant dense<0.000000e+00> : vector<8x256xf32>
    %77 = tpu.matmul %69, %3, %cst_26 {dimension_numbers = #tpu.dot_dimension_numbers<[1], [0], [0], [1], [0, 0, 1, 1], [], []>} : vector<8x128xf32>, vector<128x256xf32>, vector<8x256xf32> -> vector<8x256xf32>
    %78 = vector.extract_strided_slice %76 {offsets = [0, 0], sizes = [8, 128], strides = [1, 1]} : vector<8x384xf32> to vector<8x128xf32>
    %79 = vector.extract_strided_slice %77 {offsets = [0, 0], sizes = [8, 128], strides = [1, 1]} : vector<8x256xf32> to vector<8x128xf32>
    %80 = arith.addf %78, %79 : vector<8x128xf32>
    %81 = arith.negf %80 : vector<8x128xf32>
    %82 = math.exp %81 : vector<8x128xf32>
    %cst_27 = arith.constant 1.000000e+00 : f32
    %83 = vector.broadcast %cst_27 : f32 to vector<8x128xf32>
    %84 = arith.addf %83, %82 : vector<8x128xf32>
    %85 = arith.divf %83, %84 : vector<8x128xf32>
    %86 = vector.extract_strided_slice %76 {offsets = [0, 128], sizes = [8, 128], strides = [1, 1]} : vector<8x384xf32> to vector<8x128xf32>
    %87 = vector.extract_strided_slice %77 {offsets = [0, 128], sizes = [8, 128], strides = [1, 1]} : vector<8x256xf32> to vector<8x128xf32>
    %88 = arith.addf %86, %87 : vector<8x128xf32>
    %89 = arith.negf %88 : vector<8x128xf32>
    %90 = math.exp %89 : vector<8x128xf32>
    %cst_28 = arith.constant 1.000000e+00 : f32
    %91 = vector.broadcast %cst_28 : f32 to vector<8x128xf32>
    %92 = arith.addf %91, %90 : vector<8x128xf32>
    %93 = arith.divf %91, %92 : vector<8x128xf32>
    %94 = vector.extract_strided_slice %76 {offsets = [0, 256], sizes = [8, 128], strides = [1, 1]} : vector<8x384xf32> to vector<8x128xf32>
    %95 = arith.mulf %85, %69 : vector<8x128xf32>
    %cst_29 = arith.constant dense<0.000000e+00> : vector<8x128xf32>
    %96 = tpu.matmul %95, %4, %cst_29 {dimension_numbers = #tpu.dot_dimension_numbers<[1], [0], [0], [1], [0, 0, 1, 1], [], []>} : vector<8x128xf32>, vector<128x128xf32>, vector<8x128xf32> -> vector<8x128xf32>
    %97 = arith.addf %94, %96 : vector<8x128xf32>
    %98 = math.tanh %97 : vector<8x128xf32>
    %cst_30 = arith.constant 1.000000e+00 : f32
    %99 = vector.broadcast %cst_30 : f32 to vector<8x128xf32>
    %100 = arith.subf %99, %93 : vector<8x128xf32>
    %101 = arith.mulf %100, %69 : vector<8x128xf32>
    %102 = arith.mulf %93, %98 : vector<8x128xf32>
    %103 = arith.addf %101, %102 : vector<8x128xf32>
    %104 = arith.index_cast %c2_i32 : i32 to index
    %c0_31 = arith.constant 0 : index
    %c0_32 = arith.constant 0 : index
    %105 = vector.load %arg6[%104, %c0_31, %c0_32] : memref<8x8x128xf32, #tpu.memory_space<vmem>>, vector<1x8x128xf32>
    %106 = vector.shape_cast %105 : vector<1x8x128xf32> to vector<8x128xf32>
    %107 = vector.shape_cast %103 : vector<8x128xf32> to vector<1x8x128xf32>
    tpu.vector_store %arg6[%104, %c0_31, %c0_32], %107 {strides = array<i32>} : memref<8x8x128xf32, #tpu.memory_space<vmem>>, vector<1x8x128xf32>,
    %c3_i32 = arith.constant 3 : i32
    %108 = arith.index_cast %c3_i32 : i32 to index
    %c0_33 = arith.constant 0 : index
    %c0_34 = arith.constant 0 : index
    %109 = vector.load %arg2[%108, %c0_33, %c0_34] : memref<8x8x384xf32, #tpu.memory_space<vmem>>, vector<1x8x384xf32>
    %110 = vector.shape_cast %109 : vector<1x8x384xf32> to vector<8x384xf32>
    %cst_35 = arith.constant dense<0.000000e+00> : vector<8x256xf32>
    %111 = tpu.matmul %103, %3, %cst_35 {dimension_numbers = #tpu.dot_dimension_numbers<[1], [0], [0], [1], [0, 0, 1, 1], [], []>} : vector<8x128xf32>, vector<128x256xf32>, vector<8x256xf32> -> vector<8x256xf32>
    %112 = vector.extract_strided_slice %110 {offsets = [0, 0], sizes = [8, 128], strides = [1, 1]} : vector<8x384xf32> to vector<8x128xf32>
    %113 = vector.extract_strided_slice %111 {offsets = [0, 0], sizes = [8, 128], strides = [1, 1]} : vector<8x256xf32> to vector<8x128xf32>
    %114 = arith.addf %112, %113 : vector<8x128xf32>
    %115 = arith.negf %114 : vector<8x128xf32>
    %116 = math.exp %115 : vector<8x128xf32>
    %cst_36 = arith.constant 1.000000e+00 : f32
    %117 = vector.broadcast %cst_36 : f32 to vector<8x128xf32>
    %118 = arith.addf %117, %116 : vector<8x128xf32>
    %119 = arith.divf %117, %118 : vector<8x128xf32>
    %120 = vector.extract_strided_slice %110 {offsets = [0, 128], sizes = [8, 128], strides = [1, 1]} : vector<8x384xf32> to vector<8x128xf32>
    %121 = vector.extract_strided_slice %111 {offsets = [0, 128], sizes = [8, 128], strides = [1, 1]} : vector<8x256xf32> to vector<8x128xf32>
    %122 = arith.addf %120, %121 : vector<8x128xf32>
    %123 = arith.negf %122 : vector<8x128xf32>
    %124 = math.exp %123 : vector<8x128xf32>
    %cst_37 = arith.constant 1.000000e+00 : f32
    %125 = vector.broadcast %cst_37 : f32 to vector<8x128xf32>
    %126 = arith.addf %125, %124 : vector<8x128xf32>
    %127 = arith.divf %125, %126 : vector<8x128xf32>
    %128 = vector.extract_strided_slice %110 {offsets = [0, 256], sizes = [8, 128], strides = [1, 1]} : vector<8x384xf32> to vector<8x128xf32>
    %129 = arith.mulf %119, %103 : vector<8x128xf32>
    %cst_38 = arith.constant dense<0.000000e+00> : vector<8x128xf32>
    %130 = tpu.matmul %129, %4, %cst_38 {dimension_numbers = #tpu.dot_dimension_numbers<[1], [0], [0], [1], [0, 0, 1, 1], [], []>} : vector<8x128xf32>, vector<128x128xf32>, vector<8x128xf32> -> vector<8x128xf32>
    %131 = arith.addf %128, %130 : vector<8x128xf32>
    %132 = math.tanh %131 : vector<8x128xf32>
    %cst_39 = arith.constant 1.000000e+00 : f32
    %133 = vector.broadcast %cst_39 : f32 to vector<8x128xf32>
    %134 = arith.subf %133, %127 : vector<8x128xf32>
    %135 = arith.mulf %134, %103 : vector<8x128xf32>
    %136 = arith.mulf %127, %132 : vector<8x128xf32>
    %137 = arith.addf %135, %136 : vector<8x128xf32>
    %138 = arith.index_cast %c3_i32 : i32 to index
    %c0_40 = arith.constant 0 : index
    %c0_41 = arith.constant 0 : index
    %139 = vector.load %arg6[%138, %c0_40, %c0_41] : memref<8x8x128xf32, #tpu.memory_space<vmem>>, vector<1x8x128xf32>
    %140 = vector.shape_cast %139 : vector<1x8x128xf32> to vector<8x128xf32>
    %141 = vector.shape_cast %137 : vector<8x128xf32> to vector<1x8x128xf32>
    tpu.vector_store %arg6[%138, %c0_40, %c0_41], %141 {strides = array<i32>} : memref<8x8x128xf32, #tpu.memory_space<vmem>>, vector<1x8x128xf32>,
    %c4_i32 = arith.constant 4 : i32
    %142 = arith.index_cast %c4_i32 : i32 to index
    %c0_42 = arith.constant 0 : index
    %c0_43 = arith.constant 0 : index
    %143 = vector.load %arg2[%142, %c0_42, %c0_43] : memref<8x8x384xf32, #tpu.memory_space<vmem>>, vector<1x8x384xf32>
    %144 = vector.shape_cast %143 : vector<1x8x384xf32> to vector<8x384xf32>
    %cst_44 = arith.constant dense<0.000000e+00> : vector<8x256xf32>
    %145 = tpu.matmul %137, %3, %cst_44 {dimension_numbers = #tpu.dot_dimension_numbers<[1], [0], [0], [1], [0, 0, 1, 1], [], []>} : vector<8x128xf32>, vector<128x256xf32>, vector<8x256xf32> -> vector<8x256xf32>
    %146 = vector.extract_strided_slice %144 {offsets = [0, 0], sizes = [8, 128], strides = [1, 1]} : vector<8x384xf32> to vector<8x128xf32>
    %147 = vector.extract_strided_slice %145 {offsets = [0, 0], sizes = [8, 128], strides = [1, 1]} : vector<8x256xf32> to vector<8x128xf32>
    %148 = arith.addf %146, %147 : vector<8x128xf32>
    %149 = arith.negf %148 : vector<8x128xf32>
    %150 = math.exp %149 : vector<8x128xf32>
    %cst_45 = arith.constant 1.000000e+00 : f32
    %151 = vector.broadcast %cst_45 : f32 to vector<8x128xf32>
    %152 = arith.addf %151, %150 : vector<8x128xf32>
    %153 = arith.divf %151, %152 : vector<8x128xf32>
    %154 = vector.extract_strided_slice %144 {offsets = [0, 128], sizes = [8, 128], strides = [1, 1]} : vector<8x384xf32> to vector<8x128xf32>
    %155 = vector.extract_strided_slice %145 {offsets = [0, 128], sizes = [8, 128], strides = [1, 1]} : vector<8x256xf32> to vector<8x128xf32>
    %156 = arith.addf %154, %155 : vector<8x128xf32>
    %157 = arith.negf %156 : vector<8x128xf32>
    %158 = math.exp %157 : vector<8x128xf32>
    %cst_46 = arith.constant 1.000000e+00 : f32
    %159 = vector.broadcast %cst_46 : f32 to vector<8x128xf32>
    %160 = arith.addf %159, %158 : vector<8x128xf32>
    %161 = arith.divf %159, %160 : vector<8x128xf32>
    %162 = vector.extract_strided_slice %144 {offsets = [0, 256], sizes = [8, 128], strides = [1, 1]} : vector<8x384xf32> to vector<8x128xf32>
    %163 = arith.mulf %153, %137 : vector<8x128xf32>
    %cst_47 = arith.constant dense<0.000000e+00> : vector<8x128xf32>
    %164 = tpu.matmul %163, %4, %cst_47 {dimension_numbers = #tpu.dot_dimension_numbers<[1], [0], [0], [1], [0, 0, 1, 1], [], []>} : vector<8x128xf32>, vector<128x128xf32>, vector<8x128xf32> -> vector<8x128xf32>
    %165 = arith.addf %162, %164 : vector<8x128xf32>
    %166 = math.tanh %165 : vector<8x128xf32>
    %cst_48 = arith.constant 1.000000e+00 : f32
    %167 = vector.broadcast %cst_48 : f32 to vector<8x128xf32>
    %168 = arith.subf %167, %161 : vector<8x128xf32>
    %169 = arith.mulf %168, %137 : vector<8x128xf32>
    %170 = arith.mulf %161, %166 : vector<8x128xf32>
    %171 = arith.addf %169, %170 : vector<8x128xf32>
    %172 = arith.index_cast %c4_i32 : i32 to index
    %c0_49 = arith.constant 0 : index
    %c0_50 = arith.constant 0 : index
    %173 = vector.load %arg6[%172, %c0_49, %c0_50] : memref<8x8x128xf32, #tpu.memory_space<vmem>>, vector<1x8x128xf32>
    %174 = vector.shape_cast %173 : vector<1x8x128xf32> to vector<8x128xf32>
    %175 = vector.shape_cast %171 : vector<8x128xf32> to vector<1x8x128xf32>
    tpu.vector_store %arg6[%172, %c0_49, %c0_50], %175 {strides = array<i32>} : memref<8x8x128xf32, #tpu.memory_space<vmem>>, vector<1x8x128xf32>,
    %c5_i32 = arith.constant 5 : i32
    %176 = arith.index_cast %c5_i32 : i32 to index
    %c0_51 = arith.constant 0 : index
    %c0_52 = arith.constant 0 : index
    %177 = vector.load %arg2[%176, %c0_51, %c0_52] : memref<8x8x384xf32, #tpu.memory_space<vmem>>, vector<1x8x384xf32>
    %178 = vector.shape_cast %177 : vector<1x8x384xf32> to vector<8x384xf32>
    %cst_53 = arith.constant dense<0.000000e+00> : vector<8x256xf32>
    %179 = tpu.matmul %171, %3, %cst_53 {dimension_numbers = #tpu.dot_dimension_numbers<[1], [0], [0], [1], [0, 0, 1, 1], [], []>} : vector<8x128xf32>, vector<128x256xf32>, vector<8x256xf32> -> vector<8x256xf32>
    %180 = vector.extract_strided_slice %178 {offsets = [0, 0], sizes = [8, 128], strides = [1, 1]} : vector<8x384xf32> to vector<8x128xf32>
    %181 = vector.extract_strided_slice %179 {offsets = [0, 0], sizes = [8, 128], strides = [1, 1]} : vector<8x256xf32> to vector<8x128xf32>
    %182 = arith.addf %180, %181 : vector<8x128xf32>
    %183 = arith.negf %182 : vector<8x128xf32>
    %184 = math.exp %183 : vector<8x128xf32>
    %cst_54 = arith.constant 1.000000e+00 : f32
    %185 = vector.broadcast %cst_54 : f32 to vector<8x128xf32>
    %186 = arith.addf %185, %184 : vector<8x128xf32>
    %187 = arith.divf %185, %186 : vector<8x128xf32>
    %188 = vector.extract_strided_slice %178 {offsets = [0, 128], sizes = [8, 128], strides = [1, 1]} : vector<8x384xf32> to vector<8x128xf32>
    %189 = vector.extract_strided_slice %179 {offsets = [0, 128], sizes = [8, 128], strides = [1, 1]} : vector<8x256xf32> to vector<8x128xf32>
    %190 = arith.addf %188, %189 : vector<8x128xf32>
    %191 = arith.negf %190 : vector<8x128xf32>
    %192 = math.exp %191 : vector<8x128xf32>
    %cst_55 = arith.constant 1.000000e+00 : f32
    %193 = vector.broadcast %cst_55 : f32 to vector<8x128xf32>
    %194 = arith.addf %193, %192 : vector<8x128xf32>
    %195 = arith.divf %193, %194 : vector<8x128xf32>
    %196 = vector.extract_strided_slice %178 {offsets = [0, 256], sizes = [8, 128], strides = [1, 1]} : vector<8x384xf32> to vector<8x128xf32>
    %197 = arith.mulf %187, %171 : vector<8x128xf32>
    %cst_56 = arith.constant dense<0.000000e+00> : vector<8x128xf32>
    %198 = tpu.matmul %197, %4, %cst_56 {dimension_numbers = #tpu.dot_dimension_numbers<[1], [0], [0], [1], [0, 0, 1, 1], [], []>} : vector<8x128xf32>, vector<128x128xf32>, vector<8x128xf32> -> vector<8x128xf32>
    %199 = arith.addf %196, %198 : vector<8x128xf32>
    %200 = math.tanh %199 : vector<8x128xf32>
    %cst_57 = arith.constant 1.000000e+00 : f32
    %201 = vector.broadcast %cst_57 : f32 to vector<8x128xf32>
    %202 = arith.subf %201, %195 : vector<8x128xf32>
    %203 = arith.mulf %202, %171 : vector<8x128xf32>
    %204 = arith.mulf %195, %200 : vector<8x128xf32>
    %205 = arith.addf %203, %204 : vector<8x128xf32>
    %206 = arith.index_cast %c5_i32 : i32 to index
    %c0_58 = arith.constant 0 : index
    %c0_59 = arith.constant 0 : index
    %207 = vector.load %arg6[%206, %c0_58, %c0_59] : memref<8x8x128xf32, #tpu.memory_space<vmem>>, vector<1x8x128xf32>
    %208 = vector.shape_cast %207 : vector<1x8x128xf32> to vector<8x128xf32>
    %209 = vector.shape_cast %205 : vector<8x128xf32> to vector<1x8x128xf32>
    tpu.vector_store %arg6[%206, %c0_58, %c0_59], %209 {strides = array<i32>} : memref<8x8x128xf32, #tpu.memory_space<vmem>>, vector<1x8x128xf32>,
    %c6_i32 = arith.constant 6 : i32
    %210 = arith.index_cast %c6_i32 : i32 to index
    %c0_60 = arith.constant 0 : index
    %c0_61 = arith.constant 0 : index
    %211 = vector.load %arg2[%210, %c0_60, %c0_61] : memref<8x8x384xf32, #tpu.memory_space<vmem>>, vector<1x8x384xf32>
    %212 = vector.shape_cast %211 : vector<1x8x384xf32> to vector<8x384xf32>
    %cst_62 = arith.constant dense<0.000000e+00> : vector<8x256xf32>
    %213 = tpu.matmul %205, %3, %cst_62 {dimension_numbers = #tpu.dot_dimension_numbers<[1], [0], [0], [1], [0, 0, 1, 1], [], []>} : vector<8x128xf32>, vector<128x256xf32>, vector<8x256xf32> -> vector<8x256xf32>
    %214 = vector.extract_strided_slice %212 {offsets = [0, 0], sizes = [8, 128], strides = [1, 1]} : vector<8x384xf32> to vector<8x128xf32>
    %215 = vector.extract_strided_slice %213 {offsets = [0, 0], sizes = [8, 128], strides = [1, 1]} : vector<8x256xf32> to vector<8x128xf32>
    %216 = arith.addf %214, %215 : vector<8x128xf32>
    %217 = arith.negf %216 : vector<8x128xf32>
    %218 = math.exp %217 : vector<8x128xf32>
    %cst_63 = arith.constant 1.000000e+00 : f32
    %219 = vector.broadcast %cst_63 : f32 to vector<8x128xf32>
    %220 = arith.addf %219, %218 : vector<8x128xf32>
    %221 = arith.divf %219, %220 : vector<8x128xf32>
    %222 = vector.extract_strided_slice %212 {offsets = [0, 128], sizes = [8, 128], strides = [1, 1]} : vector<8x384xf32> to vector<8x128xf32>
    %223 = vector.extract_strided_slice %213 {offsets = [0, 128], sizes = [8, 128], strides = [1, 1]} : vector<8x256xf32> to vector<8x128xf32>
    %224 = arith.addf %222, %223 : vector<8x128xf32>
    %225 = arith.negf %224 : vector<8x128xf32>
    %226 = math.exp %225 : vector<8x128xf32>
    %cst_64 = arith.constant 1.000000e+00 : f32
    %227 = vector.broadcast %cst_64 : f32 to vector<8x128xf32>
    %228 = arith.addf %227, %226 : vector<8x128xf32>
    %229 = arith.divf %227, %228 : vector<8x128xf32>
    %230 = vector.extract_strided_slice %212 {offsets = [0, 256], sizes = [8, 128], strides = [1, 1]} : vector<8x384xf32> to vector<8x128xf32>
    %231 = arith.mulf %221, %205 : vector<8x128xf32>
    %cst_65 = arith.constant dense<0.000000e+00> : vector<8x128xf32>
    %232 = tpu.matmul %231, %4, %cst_65 {dimension_numbers = #tpu.dot_dimension_numbers<[1], [0], [0], [1], [0, 0, 1, 1], [], []>} : vector<8x128xf32>, vector<128x128xf32>, vector<8x128xf32> -> vector<8x128xf32>
    %233 = arith.addf %230, %232 : vector<8x128xf32>
    %234 = math.tanh %233 : vector<8x128xf32>
    %cst_66 = arith.constant 1.000000e+00 : f32
    %235 = vector.broadcast %cst_66 : f32 to vector<8x128xf32>
    %236 = arith.subf %235, %229 : vector<8x128xf32>
    %237 = arith.mulf %236, %205 : vector<8x128xf32>
    %238 = arith.mulf %229, %234 : vector<8x128xf32>
    %239 = arith.addf %237, %238 : vector<8x128xf32>
    %240 = arith.index_cast %c6_i32 : i32 to index
    %c0_67 = arith.constant 0 : index
    %c0_68 = arith.constant 0 : index
    %241 = vector.load %arg6[%240, %c0_67, %c0_68] : memref<8x8x128xf32, #tpu.memory_space<vmem>>, vector<1x8x128xf32>
    %242 = vector.shape_cast %241 : vector<1x8x128xf32> to vector<8x128xf32>
    %243 = vector.shape_cast %239 : vector<8x128xf32> to vector<1x8x128xf32>
    tpu.vector_store %arg6[%240, %c0_67, %c0_68], %243 {strides = array<i32>} : memref<8x8x128xf32, #tpu.memory_space<vmem>>, vector<1x8x128xf32>,
    %c7_i32 = arith.constant 7 : i32
    %244 = arith.index_cast %c7_i32 : i32 to index
    %c0_69 = arith.constant 0 : index
    %c0_70 = arith.constant 0 : index
    %245 = vector.load %arg2[%244, %c0_69, %c0_70] : memref<8x8x384xf32, #tpu.memory_space<vmem>>, vector<1x8x384xf32>
    %246 = vector.shape_cast %245 : vector<1x8x384xf32> to vector<8x384xf32>
    %cst_71 = arith.constant dense<0.000000e+00> : vector<8x256xf32>
    %247 = tpu.matmul %239, %3, %cst_71 {dimension_numbers = #tpu.dot_dimension_numbers<[1], [0], [0], [1], [0, 0, 1, 1], [], []>} : vector<8x128xf32>, vector<128x256xf32>, vector<8x256xf32> -> vector<8x256xf32>
    %248 = vector.extract_strided_slice %246 {offsets = [0, 0], sizes = [8, 128], strides = [1, 1]} : vector<8x384xf32> to vector<8x128xf32>
    %249 = vector.extract_strided_slice %247 {offsets = [0, 0], sizes = [8, 128], strides = [1, 1]} : vector<8x256xf32> to vector<8x128xf32>
    %250 = arith.addf %248, %249 : vector<8x128xf32>
    %251 = arith.negf %250 : vector<8x128xf32>
    %252 = math.exp %251 : vector<8x128xf32>
    %cst_72 = arith.constant 1.000000e+00 : f32
    %253 = vector.broadcast %cst_72 : f32 to vector<8x128xf32>
    %254 = arith.addf %253, %252 : vector<8x128xf32>
    %255 = arith.divf %253, %254 : vector<8x128xf32>
    %256 = vector.extract_strided_slice %246 {offsets = [0, 128], sizes = [8, 128], strides = [1, 1]} : vector<8x384xf32> to vector<8x128xf32>
    %257 = vector.extract_strided_slice %247 {offsets = [0, 128], sizes = [8, 128], strides = [1, 1]} : vector<8x256xf32> to vector<8x128xf32>
    %258 = arith.addf %256, %257 : vector<8x128xf32>
    %259 = arith.negf %258 : vector<8x128xf32>
    %260 = math.exp %259 : vector<8x128xf32>
    %cst_73 = arith.constant 1.000000e+00 : f32
    %261 = vector.broadcast %cst_73 : f32 to vector<8x128xf32>
    %262 = arith.addf %261, %260 : vector<8x128xf32>
    %263 = arith.divf %261, %262 : vector<8x128xf32>
    %264 = vector.extract_strided_slice %246 {offsets = [0, 256], sizes = [8, 128], strides = [1, 1]} : vector<8x384xf32> to vector<8x128xf32>
    %265 = arith.mulf %255, %239 : vector<8x128xf32>
    %cst_74 = arith.constant dense<0.000000e+00> : vector<8x128xf32>
    %266 = tpu.matmul %265, %4, %cst_74 {dimension_numbers = #tpu.dot_dimension_numbers<[1], [0], [0], [1], [0, 0, 1, 1], [], []>} : vector<8x128xf32>, vector<128x128xf32>, vector<8x128xf32> -> vector<8x128xf32>
    %267 = arith.addf %264, %266 : vector<8x128xf32>
    %268 = math.tanh %267 : vector<8x128xf32>
    %cst_75 = arith.constant 1.000000e+00 : f32
    %269 = vector.broadcast %cst_75 : f32 to vector<8x128xf32>
    %270 = arith.subf %269, %263 : vector<8x128xf32>
    %271 = arith.mulf %270, %239 : vector<8x128xf32>
    %272 = arith.mulf %263, %268 : vector<8x128xf32>
    %273 = arith.addf %271, %272 : vector<8x128xf32>
    %274 = arith.index_cast %c7_i32 : i32 to index
    %c0_76 = arith.constant 0 : index
    %c0_77 = arith.constant 0 : index
    %275 = vector.load %arg6[%274, %c0_76, %c0_77] : memref<8x8x128xf32, #tpu.memory_space<vmem>>, vector<1x8x128xf32>
    %276 = vector.shape_cast %275 : vector<1x8x128xf32> to vector<8x128xf32>
    %277 = vector.shape_cast %273 : vector<8x128xf32> to vector<1x8x128xf32>
    tpu.vector_store %arg6[%274, %c0_76, %c0_77], %277 {strides = array<i32>} : memref<8x8x128xf32, #tpu.memory_space<vmem>>, vector<1x8x128xf32>,
    %c8_i32 = arith.constant 8 : i32
    %c0_78 = arith.constant 0 : index
    %c0_79 = arith.constant 0 : index
    %278 = vector.load %arg7[%c0_78, %c0_79] : memref<8x128xf32, #tpu.memory_space<vmem>>, vector<8x128xf32>
    tpu.vector_store %arg7[%c0_78, %c0_79], %273 {strides = array<i32>} : memref<8x128xf32, #tpu.memory_space<vmem>>, vector<8x128xf32>,
    return
  }
  func.func @transform_0(%arg0: i32, %arg1: i32) -> (i32, i32, i32) {
    %c0_i32 = arith.constant 0 : i32
    %c0_i32_0 = arith.constant 0 : i32
    return %arg1, %arg0, %c0_i32 : i32, i32, i32
  }
  func.func @transform_1(%arg0: i32, %arg1: i32) -> (i32, i32) {
    %c0_i32 = arith.constant 0 : i32
    %c0_i32_0 = arith.constant 0 : i32
    %c0_i32_1 = arith.constant 0 : i32
    return %c0_i32, %c0_i32_0 : i32, i32
  }
  func.func @transform_2(%arg0: i32, %arg1: i32) -> (i32, i32) {
    %c0_i32 = arith.constant 0 : i32
    %c0_i32_0 = arith.constant 0 : i32
    %c0_i32_1 = arith.constant 0 : i32
    return %c0_i32, %c0_i32_0 : i32, i32
  }
  func.func @transform_3(%arg0: i32, %arg1: i32) -> (i32, i32) {
    %c0_i32 = arith.constant 0 : i32
    %c0_i32_0 = arith.constant 0 : i32
    %c0_i32_1 = arith.constant 0 : i32
    return %c0_i32, %c0_i32_0 : i32, i32
  }
  func.func @transform_4(%arg0: i32, %arg1: i32) -> (i32, i32, i32) {
    %c0_i32 = arith.constant 0 : i32
    %c0_i32_0 = arith.constant 0 : i32
    return %arg1, %arg0, %c0_i32 : i32, i32, i32
  }
}

</mosaic_0001>

<llo_original>
// kernel: tpu_custom_call.1
$region0: #{tpu_custom_call.1}
  #allocation0 [shape = 'u32[]', space=smem, size = 0x4, offset = 0x4, fixed_abs, tag = 'smem constant byte address 0x4 - core index']
  #allocation1 [shape = 'u32[144,128]{1,0:T(1,128)}', space=vmem, size = 0x12000, scoped, tag = 'internal scratch']
  #allocation2 [shape = 'f32[8,128]{1,0:T(8,128)}', space=vmem, size = 0x1000, scoped, tag = 'scratch operand']
  %s0 = inlined_call_operand.hbm [shape: f32[8,8,384], index: 0, kind: input, shape index: {}]
  %s1 = inlined_call_operand.hbm [shape: f32[1,128], index: 1, kind: input, shape index: {}]
  %s2 = inlined_call_operand.hbm [shape: f32[128,256], index: 2, kind: input, shape index: {}]
  %s3 = inlined_call_operand.hbm [shape: f32[128,128], index: 3, kind: input, shape index: {}]
  %s4 = inlined_call_operand.hbm [shape: f32[8,8,128], index: 4, kind: output, shape index: {}]
  %s5 = sld [smem:[#allocation0]]
  $region46: #{tpu_custom_call.1} parent=0
    _
  %s7 = ssub.s32 1, %s5
  %s8 = scalar_select 0, %s7, %s5
  $region1: #{tpu_custom_call.1} parent=0
    #allocation3 [shape = 'u8[98304]{0}', space=vmem, size = 0x18000, scoped, tag = 'input window, operand 0, single buffered']
    #allocation4 [shape = 's32[1]{0}', space=sflag, size = 0x4, scoped, tag = 'scoped memory for tpu_custom_call.1']
    #allocation5 [shape = 's32[1]{0}', space=sflag, size = 0x4, scoped, tag = 'scoped memory for tpu_custom_call.1']
    #allocation6 [shape = 'u8[512]{0}', space=vmem, size = 0x400, scoped, tag = 'input window, operand 1, single buffered']
    #allocation7 [shape = 's32[1]{0}', space=sflag, size = 0x4, scoped, tag = 'scoped memory for tpu_custom_call.1']
    #allocation8 [shape = 'u8[131072]{0}', space=vmem, size = 0x20000, scoped, tag = 'input window, operand 2, single buffered']
    #allocation9 [shape = 'u8[65536]{0}', space=vmem, size = 0x10000, scoped, tag = 'input window, operand 3, single buffered']
    #allocation10 [shape = 's32[1]{0}', space=sflag, size = 0x4, scoped, tag = 'scoped memory for tpu_custom_call.1']
    #allocation11 [shape = 'u8[32768]{0}', space=vmem, size = 0x8000, scoped, tag = 'output window, operand 0, single buffered']
    %9 = vsyncpa [#allocation4], 0
    %10 = vsyncpa [#allocation7], 0
    %11 = vsyncpa [#allocation10], 0
    %12 = vsyncpa [#allocation5], 0
    // Predicated region
    $region2: #{tpu_custom_call.1} parent=1 // pred_check
      _
    $region3: #{tpu_custom_call.1} parent=1 // pred_check_branch
      %14 = sbr.rel (0) target = $region5
    $region4: #{tpu_custom_call.1} parent=1 // pred_region
      %s16 = ssub.s32 3072, 3072
      %17 = vsyncadd [#allocation4], %s16
      %s18 = sshll.u32 [#allocation3], 4
      %s19 = int_to_ptr.vmem [resolvable:$true] %s18
      %24 = dma.hbm_to_vmem [thread:$0]  %s0, 3072, %s19, [#allocation4], 384, 384, 24
    $region5: #{tpu_custom_call.1} parent=1 // pred_fallthru
      _
    // Predicated region
    $region6: #{tpu_custom_call.1} parent=1 // pred_check
      _
    $region7: #{tpu_custom_call.1} parent=1 // pred_check_branch
      %26 = sbr.rel (0) target = $region9
    $region8: #{tpu_custom_call.1} parent=1 // pred_region
      %s28 = ssub.s32 16, 16
      %29 = vsyncadd [#allocation7], %s28
      %s31 = sshll.u32 [#allocation6], 4
      %s32 = int_to_ptr.vmem [resolvable:$true] %s31
      %34 = dma.hbm_to_vmem [thread:$0]  %s1, 16, %s32, [#allocation7]
    $region9: #{tpu_custom_call.1} parent=1 // pred_fallthru
      _
    // Predicated region
    $region10: #{tpu_custom_call.1} parent=1 // pred_check
      _
    $region11: #{tpu_custom_call.1} parent=1 // pred_check_branch
      %36 = sbr.rel (0) target = $region13
    $region12: #{tpu_custom_call.1} parent=1 // pred_region
      %s38 = ssub.s32 4096, 4096
      %39 = vsyncadd [#allocation7], %s38
      %s40 = sshll.u32 [#allocation8], 4
      %s41 = int_to_ptr.vmem [resolvable:$true] %s40
      %46 = dma.hbm_to_vmem [thread:$0]  %s2, 4096, %s41, [#allocation7], 256, 256, 16
    $region13: #{tpu_custom_call.1} parent=1 // pred_fallthru
      _
    // Predicated region
    $region14: #{tpu_custom_call.1} parent=1 // pred_check
      _
    $region15: #{tpu_custom_call.1} parent=1 // pred_check_branch
      %48 = sbr.rel (0) target = $region17
    $region16: #{tpu_custom_call.1} parent=1 // pred_region
      %s50 = ssub.s32 2048, 2048
      %51 = vsyncadd [#allocation10], %s50
      %s52 = sshll.u32 [#allocation9], 4
      %s53 = int_to_ptr.vmem [resolvable:$true] %s52
      %58 = dma.hbm_to_vmem [thread:$0]  %s3, 2048, %s53, [#allocation10], 128, 128, 8
    $region17: #{tpu_custom_call.1} parent=1 // pred_fallthru
      _
    // Predicated region
    $region18: #{tpu_custom_call.1} parent=1 // pred_check
      _
    $region19: #{tpu_custom_call.1} parent=1 // pred_check_branch
      %60 = sbr.rel (0) target = $region21
    $region20: #{tpu_custom_call.1} parent=1 // pred_region
      %61 = dma.done [#allocation4], 3072
    $region21: #{tpu_custom_call.1} parent=1 // pred_fallthru
      _
    // Predicated region
    $region22: #{tpu_custom_call.1} parent=1 // pred_check
      _
    $region23: #{tpu_custom_call.1} parent=1 // pred_check_branch
      %63 = sbr.rel (0) target = $region25
    $region24: #{tpu_custom_call.1} parent=1 // pred_region
      %64 = dma.done [#allocation7], 16
    $region25: #{tpu_custom_call.1} parent=1 // pred_fallthru
      _
    // Predicated region
    $region26: #{tpu_custom_call.1} parent=1 // pred_check
      _
    $region27: #{tpu_custom_call.1} parent=1 // pred_check_branch
      %66 = sbr.rel (0) target = $region29
    $region28: #{tpu_custom_call.1} parent=1 // pred_region
      %67 = dma.done [#allocation7], 4096
    $region29: #{tpu_custom_call.1} parent=1 // pred_fallthru
      _
    // Predicated region
    $region30: #{tpu_custom_call.1} parent=1 // pred_check
      _
    $region31: #{tpu_custom_call.1} parent=1 // pred_check_branch
      %69 = sbr.rel (0) target = $region33
    $region32: #{tpu_custom_call.1} parent=1 // pred_region
      %70 = dma.done [#allocation10], 2048
    $region33: #{tpu_custom_call.1} parent=1 // pred_fallthru
      _
    %p71 = scmp.eq.s32.totalorder 0, 0
    // Predicated region
    $region34: #{tpu_custom_call.1} parent=1 // pred_check
      %p72 = pneg %p71
    $region35: #{tpu_custom_call.1} parent=1 // pred_check_branch
      %74 = sbr.rel (%p72) target = $region37
    $region36: #{tpu_custom_call.1} parent=1 // pred_region
      %v75 = vld [vmem:[#allocation6] sm:$0x1]
      %v77 = vlaneseq
      %v78 = vshrl.u32 %v77, 7
      %v79 = vsub.s32 0, %v78
      %v80 = vrot.slane %v75, %v79
      %82 = vst [vmem:[#allocation2] sm:$0xff] %v80
    $region37: #{tpu_custom_call.1} parent=1 // pred_fallthru
      _
    %v83 = vld [vmem:[#allocation8] sm:$0xff]
    %v84 = vld [vmem:[#allocation8 + $0x8] sm:$0xff]
    %v85 = vld [vmem:[#allocation8 + $0x10] sm:$0xff]
    %v86 = vld [vmem:[#allocation8 + $0x18] sm:$0xff]
    %v87 = vld [vmem:[#allocation8 + $0x20] sm:$0xff]
    %v88 = vld [vmem:[#allocation8 + $0x28] sm:$0xff]
    %v89 = vld [vmem:[#allocation8 + $0x30] sm:$0xff]
    %v90 = vld [vmem:[#allocation8 + $0x38] sm:$0xff]
    %v91 = vld [vmem:[#allocation8 + $0x40] sm:$0xff]
    %v92 = vld [vmem:[#allocation8 + $0x48] sm:$0xff]
    %v93 = vld [vmem:[#allocation8 + $0x50] sm:$0xff]
    %v94 = vld [vmem:[#allocation8 + $0x58] sm:$0xff]
    %v95 = vld [vmem:[#allocation8 + $0x60] sm:$0xff]
    %v96 = vld [vmem:[#allocation8 + $0x68] sm:$0xff]
    %v97 = vld [vmem:[#allocation8 + $0x70] sm:$0xff]
    %v98 = vld [vmem:[#allocation8 + $0x78] sm:$0xff]
    %v99 = vld [vmem:[#allocation8 + $0x80] sm:$0xff]
    %v100 = vld [vmem:[#allocation8 + $0x88] sm:$0xff]
    %v101 = vld [vmem:[#allocation8 + $0x90] sm:$0xff]
    %v102 = vld [vmem:[#allocation8 + $0x98] sm:$0xff]
    %v103 = vld [vmem:[#allocation8 + $0xa0] sm:$0xff]
    %v104 = vld [vmem:[#allocation8 + $0xa8] sm:$0xff]
    %v105 = vld [vmem:[#allocation8 + $0xb0] sm:$0xff]
    %v106 = vld [vmem:[#allocation8 + $0xb8] sm:$0xff]
    %v107 = vld [vmem:[#allocation8 + $0xc0] sm:$0xff]
    %v108 = vld [vmem:[#allocation8 + $0xc8] sm:$0xff]
    %v109 = vld [vmem:[#allocation8 + $0xd0] sm:$0xff]
    %v110 = vld [vmem:[#allocation8 + $0xd8] sm:$0xff]
    %v111 = vld [vmem:[#allocation8 + $0xe0] sm:$0xff]
    %v112 = vld [vmem:[#allocation8 + $0xe8] sm:$0xff]
    %v113 = vld [vmem:[#allocation8 + $0xf0] sm:$0xff]
    %v114 = vld [vmem:[#allocation8 + $0xf8] sm:$0xff]
    %v115 = vld [vmem:[#allocation9] sm:$0xff]
    %v116 = vld [vmem:[#allocation9 + $0x8] sm:$0xff]
    %v117 = vld [vmem:[#allocation9 + $0x10] sm:$0xff]
    %v118 = vld [vmem:[#allocation9 + $0x18] sm:$0xff]
    %v119 = vld [vmem:[#allocation9 + $0x20] sm:$0xff]
    %v120 = vld [vmem:[#allocation9 + $0x28] sm:$0xff]
    %v121 = vld [vmem:[#allocation9 + $0x30] sm:$0xff]
    %v122 = vld [vmem:[#allocation9 + $0x38] sm:$0xff]
    %v123 = vld [vmem:[#allocation9 + $0x40] sm:$0xff]
    %v124 = vld [vmem:[#allocation9 + $0x48] sm:$0xff]
    %v125 = vld [vmem:[#allocation9 + $0x50] sm:$0xff]
    %v126 = vld [vmem:[#allocation9 + $0x58] sm:$0xff]
    %v127 = vld [vmem:[#allocation9 + $0x60] sm:$0xff]
    %v128 = vld [vmem:[#allocation9 + $0x68] sm:$0xff]
    %v129 = vld [vmem:[#allocation9 + $0x70] sm:$0xff]
    %v130 = vld [vmem:[#allocation9 + $0x78] sm:$0xff]
    %v131 = vld [vmem:[#allocation2] sm:$0xff]
    %v132 = vld [vmem:[#allocation3] sm:$0xff]
    %v133 = vld [vmem:[#allocation3 + $0x8] sm:$0xff]
    %v134 = vld [vmem:[#allocation3 + $0x10] sm:$0xff]
    %135 = vmatprep.subr.mxu0 %v84
    %136 = vmatpush1.msra.mxu0 %v83
    %137 = vmatprep.subr.mxu0 %v86
    %138 = vmatpush1.msra.mxu0 %v85
    %139 = vmatprep.subr.mxu0 %v88
    %140 = vmatpush1.msra.mxu0 %v87
    %141 = vmatprep.subr.mxu0 %v90
    %142 = vmatpush1.msra.mxu0 %v89
    %143 = vmatprep.subr.mxu0 %v92
    %144 = vmatpush1.msra.mxu0 %v91
    %145 = vmatprep.subr.mxu0 %v94
    %146 = vmatpush1.msra.mxu0 %v93
    %147 = vmatprep.subr.mxu0 %v96
    %148 = vmatpush1.msra.mxu0 %v95
    %149 = vmatprep.subr.mxu0 %v98
    %150 = vmatpush1.msra.mxu0 %v97
    %151 = vmatprep.subr.mxu0 %v100
    %152 = vmatpush1.msra.mxu0 %v99
    %153 = vmatprep.subr.mxu0 %v102
    %154 = vmatpush1.msra.mxu0 %v101
    %155 = vmatprep.subr.mxu0 %v104
    %156 = vmatpush1.msra.mxu0 %v103
    %157 = vmatprep.subr.mxu0 %v106
    %158 = vmatpush1.msra.mxu0 %v105
    %159 = vmatprep.subr.mxu0 %v108
    %160 = vmatpush1.msra.mxu0 %v107
    %161 = vmatprep.subr.mxu0 %v110
    %162 = vmatpush1.msra.mxu0 %v109
    %163 = vmatprep.subr.mxu0 %v112
    %164 = vmatpush1.msra.mxu0 %v111
    %165 = vmatprep.subr.mxu0 %v114
    %166 = vmatpush1.msra.mxu0 %v113
    %167 = vmatprep.subr.mxu0 0.0
    %168 = vmatpush1.msra.mxu0 0.0
    %169 = vmatprep.subr.mxu0 0.0
    %170 = vmatpush1.msra.mxu0 0.0
    %171 = vmatprep.subr.mxu0 0.0
    %172 = vmatpush1.msra.mxu0 0.0
    %173 = vmatprep.subr.mxu0 0.0
    %174 = vmatpush1.msra.mxu0 0.0
    %175 = vmatprep.subr.mxu0 0.0
    %176 = vmatpush1.msra.mxu0 0.0
    %177 = vmatprep.subr.mxu0 0.0
    %178 = vmatpush1.msra.mxu0 0.0
    %179 = vmatprep.subr.mxu0 0.0
    %180 = vmatpush1.msra.mxu0 0.0
    %181 = vmatprep.subr.mxu0 0.0
    %182 = vmatpush1.msra.mxu0 0.0
    %183 = vmatprep.subr.mxu0 0.0
    %184 = vmatpush1.msra.mxu0 0.0
    %185 = vmatprep.subr.mxu0 0.0
    %186 = vmatpush1.msra.mxu0 0.0
    %187 = vmatprep.subr.mxu0 0.0
    %188 = vmatpush1.msra.mxu0 0.0
    %189 = vmatprep.subr.mxu0 0.0
    %190 = vmatpush1.msra.mxu0 0.0
    %191 = vmatprep.subr.mxu0 0.0
    %192 = vmatpush1.msra.mxu0 0.0
    %193 = vmatprep.subr.mxu0 0.0
    %194 = vmatpush1.msra.mxu0 0.0
    %195 = vmatprep.subr.mxu0 0.0
    %196 = vmatpush1.msra.mxu0 0.0
    %197 = vmatprep.subr.mxu0 0.0
    %198 = vmatpush1.msra.mxu0 0.0
    %199 = vmatprep.mubr.f32.mxu0 0.0
    %200 = vmatmul.mubr.f32.gmra.mrb[0].mxu0 %v131
    %v201 = vpop.f32.mrb[0].mxu0
    %v202 = vadd.f32 0.0, %v201
    %v203 = vpop.f32.mrb[0].mxu0
    %v204 = vadd.f32 0.0, %v203
    %205 = vdwg.mxu0
    %v206 = vadd.f32 %v132, %v202
    %v207 = vxor.u32 %v206, 2147483648
    %v208 = vmul.f32 %v207, 1.442695
    %v209 = vpow.pop %v208
    %v210 = vadd.f32 %v209, 1.0
    %v211 = vrcp.pop %v210
    %v212 = vmul.f32 1.0, %v211
    %v213 = vadd.f32 %v133, %v204
    %v214 = vxor.u32 %v213, 2147483648
    %v215 = vmul.f32 %v214, 1.442695
    %v216 = vpow.pop %v215
    %v217 = vadd.f32 %v216, 1.0
    %v218 = vrcp.pop %v217
    %v219 = vmul.f32 1.0, %v218
    %v220 = vmul.f32 %v212, %v131
    %221 = vmatprep.subr.mxu0 0.0
    %222 = vmatpush1.msra.mxu0 %v115
    %223 = vmatprep.subr.mxu0 0.0
    %224 = vmatpush1.msra.mxu0 %v116
    %225 = vmatprep.subr.mxu0 0.0
    %226 = vmatpush1.msra.mxu0 %v117
    %227 = vmatprep.subr.mxu0 0.0
    %228 = vmatpush1.msra.mxu0 %v118
    %229 = vmatprep.subr.mxu0 0.0
    %230 = vmatpush1.msra.mxu0 %v119
    %231 = vmatprep.subr.mxu0 0.0
    %232 = vmatpush1.msra.mxu0 %v120
    %233 = vmatprep.subr.mxu0 0.0
    %234 = vmatpush1.msra.mxu0 %v121
    %235 = vmatprep.subr.mxu0 0.0
    %236 = vmatpush1.msra.mxu0 %v122
    %237 = vmatprep.subr.mxu0 0.0
    %238 = vmatpush1.msra.mxu0 %v123
    %239 = vmatprep.subr.mxu0 0.0
    %240 = vmatpush1.msra.mxu0 %v124
    %241 = vmatprep.subr.mxu0 0.0
    %242 = vmatpush1.msra.mxu0 %v125
    %243 = vmatprep.subr.mxu0 0.0
    %244 = vmatpush1.msra.mxu0 %v126
    %245 = vmatprep.subr.mxu0 0.0
    %246 = vmatpush1.msra.mxu0 %v127
    %247 = vmatprep.subr.mxu0 0.0
    %248 = vmatpush1.msra.mxu0 %v128
    %249 = vmatprep.subr.mxu0 0.0
    %250 = vmatpush1.msra.mxu0 %v129
    %251 = vmatprep.subr.mxu0 0.0
    %252 = vmatpush1.msra.mxu0 %v130
    %253 = vmatprep.subr.mxu0 0.0
    %254 = vmatpush1.msra.mxu0 0.0
    %255 = vmatprep.subr.mxu0 0.0
    %256 = vmatpush1.msra.mxu0 0.0
    %257 = vmatprep.subr.mxu0 0.0
    %258 = vmatpush1.msra.mxu0 0.0
    %259 = vmatprep.subr.mxu0 0.0
    %260 = vmatpush1.msra.mxu0 0.0
    %261 = vmatprep.subr.mxu0 0.0
    %262 = vmatpush1.msra.mxu0 0.0
    %263 = vmatprep.subr.mxu0 0.0
    %264 = vmatpush1.msra.mxu0 0.0
    %265 = vmatprep.subr.mxu0 0.0
    %266 = vmatpush1.msra.mxu0 0.0
    %267 = vmatprep.subr.mxu0 0.0
    %268 = vmatpush1.msra.mxu0 0.0
    %269 = vmatprep.subr.mxu0 0.0
    %270 = vmatpush1.msra.mxu0 0.0
    %271 = vmatprep.subr.mxu0 0.0
    %272 = vmatpush1.msra.mxu0 0.0
    %273 = vmatprep.subr.mxu0 0.0
    %274 = vmatpush1.msra.mxu0 0.0
    %275 = vmatprep.subr.mxu0 0.0
    %276 = vmatpush1.msra.mxu0 0.0
    %277 = vmatprep.subr.mxu0 0.0
    %278 = vmatpush1.msra.mxu0 0.0
    %279 = vmatprep.subr.mxu0 0.0
    %280 = vmatpush1.msra.mxu0 0.0
    %281 = vmatprep.subr.mxu0 0.0
    %282 = vmatpush1.msra.mxu0 0.0
    %283 = vmatprep.subr.mxu0 0.0
    %284 = vmatpush1.msra.mxu0 0.0
    %285 = vmatprep.mubr.f32.mxu0 0.0
    %286 = vmatmul.mubr.f32.gmra.mrb[0].mxu0 %v220
    %v287 = vpop.f32.mrb[0].mxu0
    %v288 = vadd.f32 0.0, %v287
    %v289 = vpop.f32.mrb[0].mxu0
    %290 = vdwg.mxu0
    %v291 = vadd.f32 %v134, %v288
    %v292 = vtanh.pop %v291
    %v293 = vsub.f32 1.0, %v219
    %v294 = vmul.f32 %v293, %v131
    %v295 = vmul.f32 %v219, %v292
    %v296 = vadd.f32 %v294, %v295
    %297 = vst [vmem:[#allocation11] sm:$0xff] %v296
    %s298 = scalar_lea.vmem [#allocation3], 24
    %v299 = vld [vmem:[%s298] sm:$0xff]
    %v300 = vld [vmem:[%s298 + $0x8] sm:$0xff]
    %v301 = vld [vmem:[%s298 + $0x10] sm:$0xff]
    %302 = vmatprep.subr.mxu0 %v84
    %303 = vmatpush1.msra.mxu0 %v83
    %304 = vmatprep.subr.mxu0 %v86
    %305 = vmatpush1.msra.mxu0 %v85
    %306 = vmatprep.subr.mxu0 %v88
    %307 = vmatpush1.msra.mxu0 %v87
    %308 = vmatprep.subr.mxu0 %v90
    %309 = vmatpush1.msra.mxu0 %v89
    %310 = vmatprep.subr.mxu0 %v92
    %311 = vmatpush1.msra.mxu0 %v91
    %312 = vmatprep.subr.mxu0 %v94
    %313 = vmatpush1.msra.mxu0 %v93
    %314 = vmatprep.subr.mxu0 %v96
    %315 = vmatpush1.msra.mxu0 %v95
    %316 = vmatprep.subr.mxu0 %v98
    %317 = vmatpush1.msra.mxu0 %v97
    %318 = vmatprep.subr.mxu0 %v100
    %319 = vmatpush1.msra.mxu0 %v99
    %320 = vmatprep.subr.mxu0 %v102
    %321 = vmatpush1.msra.mxu0 %v101
    %322 = vmatprep.subr.mxu0 %v104
    %323 = vmatpush1.msra.mxu0 %v103
    %324 = vmatprep.subr.mxu0 %v106
    %325 = vmatpush1.msra.mxu0 %v105
    %326 = vmatprep.subr.mxu0 %v108
    %327 = vmatpush1.msra.mxu0 %v107
    %328 = vmatprep.subr.mxu0 %v110
    %329 = vmatpush1.msra.mxu0 %v109
    %330 = vmatprep.subr.mxu0 %v112
    %331 = vmatpush1.msra.mxu0 %v111
    %332 = vmatprep.subr.mxu0 %v114
    %333 = vmatpush1.msra.mxu0 %v113
    %334 = vmatprep.subr.mxu0 0.0
    %335 = vmatpush1.msra.mxu0 0.0
    %336 = vmatprep.subr.mxu0 0.0
    %337 = vmatpush1.msra.mxu0 0.0
    %338 = vmatprep.subr.mxu0 0.0
    %339 = vmatpush1.msra.mxu0 0.0
    %340 = vmatprep.subr.mxu0 0.0
    %341 = vmatpush1.msra.mxu0 0.0
    %342 = vmatprep.subr.mxu0 0.0
    %343 = vmatpush1.msra.mxu0 0.0
    %344 = vmatprep.subr.mxu0 0.0
    %345 = vmatpush1.msra.mxu0 0.0
    %346 = vmatprep.subr.mxu0 0.0
    %347 = vmatpush1.msra.mxu0 0.0
    %348 = vmatprep.subr.mxu0 0.0
    %349 = vmatpush1.msra.mxu0 0.0
    %350 = vmatprep.subr.mxu0 0.0
    %351 = vmatpush1.msra.mxu0 0.0
    %352 = vmatprep.subr.mxu0 0.0
    %353 = vmatpush1.msra.mxu0 0.0
    %354 = vmatprep.subr.mxu0 0.0
    %355 = vmatpush1.msra.mxu0 0.0
    %356 = vmatprep.subr.mxu0 0.0
    %357 = vmatpush1.msra.mxu0 0.0
    %358 = vmatprep.subr.mxu0 0.0
    %359 = vmatpush1.msra.mxu0 0.0
    %360 = vmatprep.subr.mxu0 0.0
    %361 = vmatpush1.msra.mxu0 0.0
    %362 = vmatprep.subr.mxu0 0.0
    %363 = vmatpush1.msra.mxu0 0.0
    %364 = vmatprep.subr.mxu0 0.0
    %365 = vmatpush1.msra.mxu0 0.0
    %366 = vmatprep.mubr.f32.mxu0 0.0
    %367 = vmatmul.mubr.f32.gmra.mrb[0].mxu0 %v296
    %v368 = vpop.f32.mrb[0].mxu0
    %v369 = vadd.f32 0.0, %v368
    %v370 = vpop.f32.mrb[0].mxu0
    %v371 = vadd.f32 0.0, %v370
    %372 = vdwg.mxu0
    %v373 = vadd.f32 %v299, %v369
    %v374 = vxor.u32 %v373, 2147483648
    %v375 = vmul.f32 %v374, 1.442695
    %v376 = vpow.pop %v375
    %v377 = vadd.f32 %v376, 1.0
    %v378 = vrcp.pop %v377
    %v379 = vmul.f32 1.0, %v378
    %v380 = vadd.f32 %v300, %v371
    %v381 = vxor.u32 %v380, 2147483648
    %v382 = vmul.f32 %v381, 1.442695
    %v383 = vpow.pop %v382
    %v384 = vadd.f32 %v383, 1.0
    %v385 = vrcp.pop %v384
    %v386 = vmul.f32 1.0, %v385
    %v387 = vmul.f32 %v379, %v296
    %388 = vmatprep.subr.mxu0 0.0
    %389 = vmatpush1.msra.mxu0 %v115
    %390 = vmatprep.subr.mxu0 0.0
    %391 = vmatpush1.msra.mxu0 %v116
    %392 = vmatprep.subr.mxu0 0.0
    %393 = vmatpush1.msra.mxu0 %v117
    %394 = vmatprep.subr.mxu0 0.0
    %395 = vmatpush1.msra.mxu0 %v118
    %396 = vmatprep.subr.mxu0 0.0
    %397 = vmatpush1.msra.mxu0 %v119
    %398 = vmatprep.subr.mxu0 0.0
    %399 = vmatpush1.msra.mxu0 %v120
    %400 = vmatprep.subr.mxu0 0.0
    %401 = vmatpush1.msra.mxu0 %v121
    %402 = vmatprep.subr.mxu0 0.0
    %403 = vmatpush1.msra.mxu0 %v122
    %404 = vmatprep.subr.mxu0 0.0
    %405 = vmatpush1.msra.mxu0 %v123
    %406 = vmatprep.subr.mxu0 0.0
    %407 = vmatpush1.msra.mxu0 %v124
    %408 = vmatprep.subr.mxu0 0.0
    %409 = vmatpush1.msra.mxu0 %v125
    %410 = vmatprep.subr.mxu0 0.0
    %411 = vmatpush1.msra.mxu0 %v126
    %412 = vmatprep.subr.mxu0 0.0
    %413 = vmatpush1.msra.mxu0 %v127
    %414 = vmatprep.subr.mxu0 0.0
    %415 = vmatpush1.msra.mxu0 %v128
    %416 = vmatprep.subr.mxu0 0.0
    %417 = vmatpush1.msra.mxu0 %v129
    %418 = vmatprep.subr.mxu0 0.0
    %419 = vmatpush1.msra.mxu0 %v130
    %420 = vmatprep.subr.mxu0 0.0
    %421 = vmatpush1.msra.mxu0 0.0
    %422 = vmatprep.subr.mxu0 0.0
    %423 = vmatpush1.msra.mxu0 0.0
    %424 = vmatprep.subr.mxu0 0.0
    %425 = vmatpush1.msra.mxu0 0.0
    %426 = vmatprep.subr.mxu0 0.0
    %427 = vmatpush1.msra.mxu0 0.0
    %428 = vmatprep.subr.mxu0 0.0
    %429 = vmatpush1.msra.mxu0 0.0
    %430 = vmatprep.subr.mxu0 0.0
    %431 = vmatpush1.msra.mxu0 0.0
    %432 = vmatprep.subr.mxu0 0.0
    %433 = vmatpush1.msra.mxu0 0.0
    %434 = vmatprep.subr.mxu0 0.0
    %435 = vmatpush1.msra.mxu0 0.0
    %436 = vmatprep.subr.mxu0 0.0
    %437 = vmatpush1.msra.mxu0 0.0
    %438 = vmatprep.subr.mxu0 0.0
    %439 = vmatpush1.msra.mxu0 0.0
    %440 = vmatprep.subr.mxu0 0.0
    %441 = vmatpush1.msra.mxu0 0.0
    %442 = vmatprep.subr.mxu0 0.0
    %443 = vmatpush1.msra.mxu0 0.0
    %444 = vmatprep.subr.mxu0 0.0
    %445 = vmatpush1.msra.mxu0 0.0
    %446 = vmatprep.subr.mxu0 0.0
    %447 = vmatpush1.msra.mxu0 0.0
    %448 = vmatprep.subr.mxu0 0.0
    %449 = vmatpush1.msra.mxu0 0.0
    %450 = vmatprep.subr.mxu0 0.0
    %451 = vmatpush1.msra.mxu0 0.0
    %452 = vmatprep.mubr.f32.mxu0 0.0
    %453 = vmatmul.mubr.f32.gmra.mrb[0].mxu0 %v387
    %v454 = vpop.f32.mrb[0].mxu0
    %v455 = vadd.f32 0.0, %v454
    %v456 = vpop.f32.mrb[0].mxu0
    %457 = vdwg.mxu0
    %v458 = vadd.f32 %v301, %v455
    %v459 = vtanh.pop %v458
    %v460 = vsub.f32 1.0, %v386
    %v461 = vmul.f32 %v460, %v296
    %v462 = vmul.f32 %v386, %v459
    %v463 = vadd.f32 %v461, %v462
    %s464 = scalar_lea.vmem [#allocation11], 8
    %465 = vst [vmem:[%s464] sm:$0xff] %v463
    %s466 = scalar_lea.vmem [#allocation3], 48
    %v467 = vld [vmem:[%s466] sm:$0xff]
    %v468 = vld [vmem:[%s466 + $0x8] sm:$0xff]
    %v469 = vld [vmem:[%s466 + $0x10] sm:$0xff]
    %470 = vmatprep.subr.mxu0 %v84
    %471 = vmatpush1.msra.mxu0 %v83
    %472 = vmatprep.subr.mxu0 %v86
    %473 = vmatpush1.msra.mxu0 %v85
    %474 = vmatprep.subr.mxu0 %v88
    %475 = vmatpush1.msra.mxu0 %v87
    %476 = vmatprep.subr.mxu0 %v90
    %477 = vmatpush1.msra.mxu0 %v89
    %478 = vmatprep.subr.mxu0 %v92
    %479 = vmatpush1.msra.mxu0 %v91
    %480 = vmatprep.subr.mxu0 %v94
    %481 = vmatpush1.msra.mxu0 %v93
    %482 = vmatprep.subr.mxu0 %v96
    %483 = vmatpush1.msra.mxu0 %v95
    %484 = vmatprep.subr.mxu0 %v98
    %485 = vmatpush1.msra.mxu0 %v97
    %486 = vmatprep.subr.mxu0 %v100
    %487 = vmatpush1.msra.mxu0 %v99
    %488 = vmatprep.subr.mxu0 %v102
    %489 = vmatpush1.msra.mxu0 %v101
    %490 = vmatprep.subr.mxu0 %v104
    %491 = vmatpush1.msra.mxu0 %v103
    %492 = vmatprep.subr.mxu0 %v106
    %493 = vmatpush1.msra.mxu0 %v105
    %494 = vmatprep.subr.mxu0 %v108
    %495 = vmatpush1.msra.mxu0 %v107
    %496 = vmatprep.subr.mxu0 %v110
    %497 = vmatpush1.msra.mxu0 %v109
    %498 = vmatprep.subr.mxu0 %v112
    %499 = vmatpush1.msra.mxu0 %v111
    %500 = vmatprep.subr.mxu0 %v114
    %501 = vmatpush1.msra.mxu0 %v113
    %502 = vmatprep.subr.mxu0 0.0
    %503 = vmatpush1.msra.mxu0 0.0
    %504 = vmatprep.subr.mxu0 0.0
    %505 = vmatpush1.msra.mxu0 0.0
    %506 = vmatprep.subr.mxu0 0.0
    %507 = vmatpush1.msra.mxu0 0.0
    %508 = vmatprep.subr.mxu0 0.0
    %509 = vmatpush1.msra.mxu0 0.0
    %510 = vmatprep.subr.mxu0 0.0
    %511 = vmatpush1.msra.mxu0 0.0
    %512 = vmatprep.subr.mxu0 0.0
    %513 = vmatpush1.msra.mxu0 0.0
    %514 = vmatprep.subr.mxu0 0.0
    %515 = vmatpush1.msra.mxu0 0.0
    %516 = vmatprep.subr.mxu0 0.0
    %517 = vmatpush1.msra.mxu0 0.0
    %518 = vmatprep.subr.mxu0 0.0
    %519 = vmatpush1.msra.mxu0 0.0
    %520 = vmatprep.subr.mxu0 0.0
    %521 = vmatpush1.msra.mxu0 0.0
    %522 = vmatprep.subr.mxu0 0.0
    %523 = vmatpush1.msra.mxu0 0.0
    %524 = vmatprep.subr.mxu0 0.0
    %525 = vmatpush1.msra.mxu0 0.0
    %526 = vmatprep.subr.mxu0 0.0
    %527 = vmatpush1.msra.mxu0 0.0
    %528 = vmatprep.subr.mxu0 0.0
    %529 = vmatpush1.msra.mxu0 0.0
    %530 = vmatprep.subr.mxu0 0.0
    %531 = vmatpush1.msra.mxu0 0.0
    %532 = vmatprep.subr.mxu0 0.0
    %533 = vmatpush1.msra.mxu0 0.0
    %534 = vmatprep.mubr.f32.mxu0 0.0
    %535 = vmatmul.mubr.f32.gmra.mrb[0].mxu0 %v463
    %v536 = vpop.f32.mrb[0].mxu0
    %v537 = vadd.f32 0.0, %v536
    %v538 = vpop.f32.mrb[0].mxu0
    %v539 = vadd.f32 0.0, %v538
    %540 = vdwg.mxu0
    %v541 = vadd.f32 %v467, %v537
    %v542 = vxor.u32 %v541, 2147483648
    %v543 = vmul.f32 %v542, 1.442695
    %v544 = vpow.pop %v543
    %v545 = vadd.f32 %v544, 1.0
    %v546 = vrcp.pop %v545
    %v547 = vmul.f32 1.0, %v546
    %v548 = vadd.f32 %v468, %v539
    %v549 = vxor.u32 %v548, 2147483648
    %v550 = vmul.f32 %v549, 1.442695
    %v551 = vpow.pop %v550
    %v552 = vadd.f32 %v551, 1.0
    %v553 = vrcp.pop %v552
    %v554 = vmul.f32 1.0, %v553
    %v555 = vmul.f32 %v547, %v463
    %556 = vmatprep.subr.mxu0 0.0
    %557 = vmatpush1.msra.mxu0 %v115
    %558 = vmatprep.subr.mxu0 0.0
    %559 = vmatpush1.msra.mxu0 %v116
    %560 = vmatprep.subr.mxu0 0.0
    %561 = vmatpush1.msra.mxu0 %v117
    %562 = vmatprep.subr.mxu0 0.0
    %563 = vmatpush1.msra.mxu0 %v118
    %564 = vmatprep.subr.mxu0 0.0
    %565 = vmatpush1.msra.mxu0 %v119
    %566 = vmatprep.subr.mxu0 0.0
    %567 = vmatpush1.msra.mxu0 %v120
    %568 = vmatprep.subr.mxu0 0.0
    %569 = vmatpush1.msra.mxu0 %v121
    %570 = vmatprep.subr.mxu0 0.0
    %571 = vmatpush1.msra.mxu0 %v122
    %572 = vmatprep.subr.mxu0 0.0
    %573 = vmatpush1.msra.mxu0 %v123
    %574 = vmatprep.subr.mxu0 0.0
    %575 = vmatpush1.msra.mxu0 %v124
    %576 = vmatprep.subr.mxu0 0.0
    %577 = vmatpush1.msra.mxu0 %v125
    %578 = vmatprep.subr.mxu0 0.0
    %579 = vmatpush1.msra.mxu0 %v126
    %580 = vmatprep.subr.mxu0 0.0
    %581 = vmatpush1.msra.mxu0 %v127
    %582 = vmatprep.subr.mxu0 0.0
    %583 = vmatpush1.msra.mxu0 %v128
    %584 = vmatprep.subr.mxu0 0.0
    %585 = vmatpush1.msra.mxu0 %v129
    %586 = vmatprep.subr.mxu0 0.0
    %587 = vmatpush1.msra.mxu0 %v130
    %588 = vmatprep.subr.mxu0 0.0
    %589 = vmatpush1.msra.mxu0 0.0
    %590 = vmatprep.subr.mxu0 0.0
    %591 = vmatpush1.msra.mxu0 0.0
    %592 = vmatprep.subr.mxu0 0.0
    %593 = vmatpush1.msra.mxu0 0.0
    %594 = vmatprep.subr.mxu0 0.0
    %595 = vmatpush1.msra.mxu0 0.0
    %596 = vmatprep.subr.mxu0 0.0
    %597 = vmatpush1.msra.mxu0 0.0
    %598 = vmatprep.subr.mxu0 0.0
    %599 = vmatpush1.msra.mxu0 0.0
    %600 = vmatprep.subr.mxu0 0.0
    %601 = vmatpush1.msra.mxu0 0.0
    %602 = vmatprep.subr.mxu0 0.0
    %603 = vmatpush1.msra.mxu0 0.0
    %604 = vmatprep.subr.mxu0 0.0
    %605 = vmatpush1.msra.mxu0 0.0
    %606 = vmatprep.subr.mxu0 0.0
    %607 = vmatpush1.msra.mxu0 0.0
    %608 = vmatprep.subr.mxu0 0.0
    %609 = vmatpush1.msra.mxu0 0.0
    %610 = vmatprep.subr.mxu0 0.0
    %611 = vmatpush1.msra.mxu0 0.0
    %612 = vmatprep.subr.mxu0 0.0
    %613 = vmatpush1.msra.mxu0 0.0
    %614 = vmatprep.subr.mxu0 0.0
    %615 = vmatpush1.msra.mxu0 0.0
    %616 = vmatprep.subr.mxu0 0.0
    %617 = vmatpush1.msra.mxu0 0.0
    %618 = vmatprep.subr.mxu0 0.0
    %619 = vmatpush1.msra.mxu0 0.0
    %620 = vmatprep.mubr.f32.mxu0 0.0
    %621 = vmatmul.mubr.f32.gmra.mrb[0].mxu0 %v555
    %v622 = vpop.f32.mrb[0].mxu0
    %v623 = vadd.f32 0.0, %v622
    %v624 = vpop.f32.mrb[0].mxu0
    %625 = vdwg.mxu0
    %v626 = vadd.f32 %v469, %v623
    %v627 = vtanh.pop %v626
    %v628 = vsub.f32 1.0, %v554
    %v629 = vmul.f32 %v628, %v463
    %v630 = vmul.f32 %v554, %v627
    %v631 = vadd.f32 %v629, %v630
    %s632 = scalar_lea.vmem [#allocation11], 16
    %633 = vst [vmem:[%s632] sm:$0xff] %v631
    %s634 = scalar_lea.vmem [#allocation3], 72
    %v635 = vld [vmem:[%s634] sm:$0xff]
    %v636 = vld [vmem:[%s634 + $0x8] sm:$0xff]
    %v637 = vld [vmem:[%s634 + $0x10] sm:$0xff]
    %638 = vmatprep.subr.mxu0 %v84
    %639 = vmatpush1.msra.mxu0 %v83
    %640 = vmatprep.subr.mxu0 %v86
    %641 = vmatpush1.msra.mxu0 %v85
    %642 = vmatprep.subr.mxu0 %v88
    %643 = vmatpush1.msra.mxu0 %v87
    %644 = vmatprep.subr.mxu0 %v90
    %645 = vmatpush1.msra.mxu0 %v89
    %646 = vmatprep.subr.mxu0 %v92
    %647 = vmatpush1.msra.mxu0 %v91
    %648 = vmatprep.subr.mxu0 %v94
    %649 = vmatpush1.msra.mxu0 %v93
    %650 = vmatprep.subr.mxu0 %v96
    %651 = vmatpush1.msra.mxu0 %v95
    %652 = vmatprep.subr.mxu0 %v98
    %653 = vmatpush1.msra.mxu0 %v97
    %654 = vmatprep.subr.mxu0 %v100
    %655 = vmatpush1.msra.mxu0 %v99
    %656 = vmatprep.subr.mxu0 %v102
    %657 = vmatpush1.msra.mxu0 %v101
    %658 = vmatprep.subr.mxu0 %v104
    %659 = vmatpush1.msra.mxu0 %v103
    %660 = vmatprep.subr.mxu0 %v106
    %661 = vmatpush1.msra.mxu0 %v105
    %662 = vmatprep.subr.mxu0 %v108
    %663 = vmatpush1.msra.mxu0 %v107
    %664 = vmatprep.subr.mxu0 %v110
    %665 = vmatpush1.msra.mxu0 %v109
    %666 = vmatprep.subr.mxu0 %v112
    %667 = vmatpush1.msra.mxu0 %v111
    %668 = vmatprep.subr.mxu0 %v114
    %669 = vmatpush1.msra.mxu0 %v113
    %670 = vmatprep.subr.mxu0 0.0
    %671 = vmatpush1.msra.mxu0 0.0
    %672 = vmatprep.subr.mxu0 0.0
    %673 = vmatpush1.msra.mxu0 0.0
    %674 = vmatprep.subr.mxu0 0.0
    %675 = vmatpush1.msra.mxu0 0.0
    %676 = vmatprep.subr.mxu0 0.0
    %677 = vmatpush1.msra.mxu0 0.0
    %678 = vmatprep.subr.mxu0 0.0
    %679 = vmatpush1.msra.mxu0 0.0
    %680 = vmatprep.subr.mxu0 0.0
    %681 = vmatpush1.msra.mxu0 0.0
    %682 = vmatprep.subr.mxu0 0.0
    %683 = vmatpush1.msra.mxu0 0.0
    %684 = vmatprep.subr.mxu0 0.0
    %685 = vmatpush1.msra.mxu0 0.0
    %686 = vmatprep.subr.mxu0 0.0
    %687 = vmatpush1.msra.mxu0 0.0
    %688 = vmatprep.subr.mxu0 0.0
    %689 = vmatpush1.msra.mxu0 0.0
    %690 = vmatprep.subr.mxu0 0.0
    %691 = vmatpush1.msra.mxu0 0.0
    %692 = vmatprep.subr.mxu0 0.0
    %693 = vmatpush1.msra.mxu0 0.0
    %694 = vmatprep.subr.mxu0 0.0
    %695 = vmatpush1.msra.mxu0 0.0
    %696 = vmatprep.subr.mxu0 0.0
    %697 = vmatpush1.msra.mxu0 0.0
    %698 = vmatprep.subr.mxu0 0.0
    %699 = vmatpush1.msra.mxu0 0.0
    %700 = vmatprep.subr.mxu0 0.0
    %701 = vmatpush1.msra.mxu0 0.0
    %702 = vmatprep.mubr.f32.mxu0 0.0
    %703 = vmatmul.mubr.f32.gmra.mrb[0].mxu0 %v631
    %v704 = vpop.f32.mrb[0].mxu0
    %v705 = vadd.f32 0.0, %v704
    %v706 = vpop.f32.mrb[0].mxu0
    %v707 = vadd.f32 0.0, %v706
    %708 = vdwg.mxu0
    %v709 = vadd.f32 %v635, %v705
    %v710 = vxor.u32 %v709, 2147483648
    %v711 = vmul.f32 %v710, 1.442695
    %v712 = vpow.pop %v711
    %v713 = vadd.f32 %v712, 1.0
    %v714 = vrcp.pop %v713
    %v715 = vmul.f32 1.0, %v714
    %v716 = vadd.f32 %v636, %v707
    %v717 = vxor.u32 %v716, 2147483648
    %v718 = vmul.f32 %v717, 1.442695
    %v719 = vpow.pop %v718
    %v720 = vadd.f32 %v719, 1.0
    %v721 = vrcp.pop %v720
    %v722 = vmul.f32 1.0, %v721
    %v723 = vmul.f32 %v715, %v631
    %724 = vmatprep.subr.mxu0 0.0
    %725 = vmatpush1.msra.mxu0 %v115
    %726 = vmatprep.subr.mxu0 0.0
    %727 = vmatpush1.msra.mxu0 %v116
    %728 = vmatprep.subr.mxu0 0.0
    %729 = vmatpush1.msra.mxu0 %v117
    %730 = vmatprep.subr.mxu0 0.0
    %731 = vmatpush1.msra.mxu0 %v118
    %732 = vmatprep.subr.mxu0 0.0
    %733 = vmatpush1.msra.mxu0 %v119
    %734 = vmatprep.subr.mxu0 0.0
    %735 = vmatpush1.msra.mxu0 %v120
    %736 = vmatprep.subr.mxu0 0.0
    %737 = vmatpush1.msra.mxu0 %v121
    %738 = vmatprep.subr.mxu0 0.0
    %739 = vmatpush1.msra.mxu0 %v122
    %740 = vmatprep.subr.mxu0 0.0
    %741 = vmatpush1.msra.mxu0 %v123
    %742 = vmatprep.subr.mxu0 0.0
    %743 = vmatpush1.msra.mxu0 %v124
    %744 = vmatprep.subr.mxu0 0.0
    %745 = vmatpush1.msra.mxu0 %v125
    %746 = vmatprep.subr.mxu0 0.0
    %747 = vmatpush1.msra.mxu0 %v126
    %748 = vmatprep.subr.mxu0 0.0
    %749 = vmatpush1.msra.mxu0 %v127
    %750 = vmatprep.subr.mxu0 0.0
    %751 = vmatpush1.msra.mxu0 %v128
    %752 = vmatprep.subr.mxu0 0.0
    %753 = vmatpush1.msra.mxu0 %v129
    %754 = vmatprep.subr.mxu0 0.0
    %755 = vmatpush1.msra.mxu0 %v130
    %756 = vmatprep.subr.mxu0 0.0
    %757 = vmatpush1.msra.mxu0 0.0
    %758 = vmatprep.subr.mxu0 0.0
    %759 = vmatpush1.msra.mxu0 0.0
    %760 = vmatprep.subr.mxu0 0.0
    %761 = vmatpush1.msra.mxu0 0.0
    %762 = vmatprep.subr.mxu0 0.0
    %763 = vmatpush1.msra.mxu0 0.0
    %764 = vmatprep.subr.mxu0 0.0
    %765 = vmatpush1.msra.mxu0 0.0
    %766 = vmatprep.subr.mxu0 0.0
    %767 = vmatpush1.msra.mxu0 0.0
    %768 = vmatprep.subr.mxu0 0.0
    %769 = vmatpush1.msra.mxu0 0.0
    %770 = vmatprep.subr.mxu0 0.0
    %771 = vmatpush1.msra.mxu0 0.0
    %772 = vmatprep.subr.mxu0 0.0
    %773 = vmatpush1.msra.mxu0 0.0
    %774 = vmatprep.subr.mxu0 0.0
    %775 = vmatpush1.msra.mxu0 0.0
    %776 = vmatprep.subr.mxu0 0.0
    %777 = vmatpush1.msra.mxu0 0.0
    %778 = vmatprep.subr.mxu0 0.0
    %779 = vmatpush1.msra.mxu0 0.0
    %780 = vmatprep.subr.mxu0 0.0
    %781 = vmatpush1.msra.mxu0 0.0
    %782 = vmatprep.subr.mxu0 0.0
    %783 = vmatpush1.msra.mxu0 0.0
    %784 = vmatprep.subr.mxu0 0.0
    %785 = vmatpush1.msra.mxu0 0.0
    %786 = vmatprep.subr.mxu0 0.0
    %787 = vmatpush1.msra.mxu0 0.0
    %788 = vmatprep.mubr.f32.mxu0 0.0
    %789 = vmatmul.mubr.f32.gmra.mrb[0].mxu0 %v723
    %v790 = vpop.f32.mrb[0].mxu0
    %v791 = vadd.f32 0.0, %v790
    %v792 = vpop.f32.mrb[0].mxu0
    %793 = vdwg.mxu0
    %v794 = vadd.f32 %v637, %v791
    %v795 = vtanh.pop %v794
    %v796 = vsub.f32 1.0, %v722
    %v797 = vmul.f32 %v796, %v631
    %v798 = vmul.f32 %v722, %v795
    %v799 = vadd.f32 %v797, %v798
    %s800 = scalar_lea.vmem [#allocation11], 24
    %801 = vst [vmem:[%s800] sm:$0xff] %v799
    %s802 = scalar_lea.vmem [#allocation3], 96
    %v803 = vld [vmem:[%s802] sm:$0xff]
    %v804 = vld [vmem:[%s802 + $0x8] sm:$0xff]
    %v805 = vld [vmem:[%s802 + $0x10] sm:$0xff]
    %806 = vmatprep.subr.mxu0 %v84
    %807 = vmatpush1.msra.mxu0 %v83
    %808 = vmatprep.subr.mxu0 %v86
    %809 = vmatpush1.msra.mxu0 %v85
    %810 = vmatprep.subr.mxu0 %v88
    %811 = vmatpush1.msra.mxu0 %v87
    %812 = vmatprep.subr.mxu0 %v90
    %813 = vmatpush1.msra.mxu0 %v89
    %814 = vmatprep.subr.mxu0 %v92
    %815 = vmatpush1.msra.mxu0 %v91
    %816 = vmatprep.subr.mxu0 %v94
    %817 = vmatpush1.msra.mxu0 %v93
    %818 = vmatprep.subr.mxu0 %v96
    %819 = vmatpush1.msra.mxu0 %v95
    %820 = vmatprep.subr.mxu0 %v98
    %821 = vmatpush1.msra.mxu0 %v97
    %822 = vmatprep.subr.mxu0 %v100
    %823 = vmatpush1.msra.mxu0 %v99
    %824 = vmatprep.subr.mxu0 %v102
    %825 = vmatpush1.msra.mxu0 %v101
    %826 = vmatprep.subr.mxu0 %v104
    %827 = vmatpush1.msra.mxu0 %v103
    %828 = vmatprep.subr.mxu0 %v106
    %829 = vmatpush1.msra.mxu0 %v105
    %830 = vmatprep.subr.mxu0 %v108
    %831 = vmatpush1.msra.mxu0 %v107
    %832 = vmatprep.subr.mxu0 %v110
    %833 = vmatpush1.msra.mxu0 %v109
    %834 = vmatprep.subr.mxu0 %v112
    %835 = vmatpush1.msra.mxu0 %v111
    %836 = vmatprep.subr.mxu0 %v114
    %837 = vmatpush1.msra.mxu0 %v113
    %838 = vmatprep.subr.mxu0 0.0
    %839 = vmatpush1.msra.mxu0 0.0
    %840 = vmatprep.subr.mxu0 0.0
    %841 = vmatpush1.msra.mxu0 0.0
    %842 = vmatprep.subr.mxu0 0.0
    %843 = vmatpush1.msra.mxu0 0.0
    %844 = vmatprep.subr.mxu0 0.0
    %845 = vmatpush1.msra.mxu0 0.0
    %846 = vmatprep.subr.mxu0 0.0
    %847 = vmatpush1.msra.mxu0 0.0
    %848 = vmatprep.subr.mxu0 0.0
    %849 = vmatpush1.msra.mxu0 0.0
    %850 = vmatprep.subr.mxu0 0.0
    %851 = vmatpush1.msra.mxu0 0.0
    %852 = vmatprep.subr.mxu0 0.0
    %853 = vmatpush1.msra.mxu0 0.0
    %854 = vmatprep.subr.mxu0 0.0
    %855 = vmatpush1.msra.mxu0 0.0
    %856 = vmatprep.subr.mxu0 0.0
    %857 = vmatpush1.msra.mxu0 0.0
    %858 = vmatprep.subr.mxu0 0.0
    %859 = vmatpush1.msra.mxu0 0.0
    %860 = vmatprep.subr.mxu0 0.0
    %861 = vmatpush1.msra.mxu0 0.0
    %862 = vmatprep.subr.mxu0 0.0
    %863 = vmatpush1.msra.mxu0 0.0
    %864 = vmatprep.subr.mxu0 0.0
    %865 = vmatpush1.msra.mxu0 0.0
    %866 = vmatprep.subr.mxu0 0.0
    %867 = vmatpush1.msra.mxu0 0.0
    %868 = vmatprep.subr.mxu0 0.0
    %869 = vmatpush1.msra.mxu0 0.0
    %870 = vmatprep.mubr.f32.mxu0 0.0
    %871 = vmatmul.mubr.f32.gmra.mrb[0].mxu0 %v799
    %v872 = vpop.f32.mrb[0].mxu0
    %v873 = vadd.f32 0.0, %v872
    %v874 = vpop.f32.mrb[0].mxu0
    %v875 = vadd.f32 0.0, %v874
    %876 = vdwg.mxu0
    %v877 = vadd.f32 %v803, %v873
    %v878 = vxor.u32 %v877, 2147483648
    %v879 = vmul.f32 %v878, 1.442695
    %v880 = vpow.pop %v879
    %v881 = vadd.f32 %v880, 1.0
    %v882 = vrcp.pop %v881
    %v883 = vmul.f32 1.0, %v882
    %v884 = vadd.f32 %v804, %v875
    %v885 = vxor.u32 %v884, 2147483648
    %v886 = vmul.f32 %v885, 1.442695
    %v887 = vpow.pop %v886
    %v888 = vadd.f32 %v887, 1.0
    %v889 = vrcp.pop %v888
    %v890 = vmul.f32 1.0, %v889
    %v891 = vmul.f32 %v883, %v799
    %892 = vmatprep.subr.mxu0 0.0
    %893 = vmatpush1.msra.mxu0 %v115
    %894 = vmatprep.subr.mxu0 0.0
    %895 = vmatpush1.msra.mxu0 %v116
    %896 = vmatprep.subr.mxu0 0.0
    %897 = vmatpush1.msra.mxu0 %v117
    %898 = vmatprep.subr.mxu0 0.0
    %899 = vmatpush1.msra.mxu0 %v118
    %900 = vmatprep.subr.mxu0 0.0
    %901 = vmatpush1.msra.mxu0 %v119
    %902 = vmatprep.subr.mxu0 0.0
    %903 = vmatpush1.msra.mxu0 %v120
    %904 = vmatprep.subr.mxu0 0.0
    %905 = vmatpush1.msra.mxu0 %v121
    %906 = vmatprep.subr.mxu0 0.0
    %907 = vmatpush1.msra.mxu0 %v122
    %908 = vmatprep.subr.mxu0 0.0
    %909 = vmatpush1.msra.mxu0 %v123
    %910 = vmatprep.subr.mxu0 0.0
    %911 = vmatpush1.msra.mxu0 %v124
    %912 = vmatprep.subr.mxu0 0.0
    %913 = vmatpush1.msra.mxu0 %v125
    %914 = vmatprep.subr.mxu0 0.0
    %915 = vmatpush1.msra.mxu0 %v126
    %916 = vmatprep.subr.mxu0 0.0
    %917 = vmatpush1.msra.mxu0 %v127
    %918 = vmatprep.subr.mxu0 0.0
    %919 = vmatpush1.msra.mxu0 %v128
    %920 = vmatprep.subr.mxu0 0.0
    %921 = vmatpush1.msra.mxu0 %v129
    %922 = vmatprep.subr.mxu0 0.0
    %923 = vmatpush1.msra.mxu0 %v130
    %924 = vmatprep.subr.mxu0 0.0
    %925 = vmatpush1.msra.mxu0 0.0
    %926 = vmatprep.subr.mxu0 0.0
    %927 = vmatpush1.msra.mxu0 0.0
    %928 = vmatprep.subr.mxu0 0.0
    %929 = vmatpush1.msra.mxu0 0.0
    %930 = vmatprep.subr.mxu0 0.0
    %931 = vmatpush1.msra.mxu0 0.0
    %932 = vmatprep.subr.mxu0 0.0
    %933 = vmatpush1.msra.mxu0 0.0
    %934 = vmatprep.subr.mxu0 0.0
    %935 = vmatpush1.msra.mxu0 0.0
    %936 = vmatprep.subr.mxu0 0.0
    %937 = vmatpush1.msra.mxu0 0.0
    %938 = vmatprep.subr.mxu0 0.0
    %939 = vmatpush1.msra.mxu0 0.0
    %940 = vmatprep.subr.mxu0 0.0
    %941 = vmatpush1.msra.mxu0 0.0
    %942 = vmatprep.subr.mxu0 0.0
    %943 = vmatpush1.msra.mxu0 0.0
    %944 = vmatprep.subr.mxu0 0.0
    %945 = vmatpush1.msra.mxu0 0.0
    %946 = vmatprep.subr.mxu0 0.0
    %947 = vmatpush1.msra.mxu0 0.0
    %948 = vmatprep.subr.mxu0 0.0
    %949 = vmatpush1.msra.mxu0 0.0
    %950 = vmatprep.subr.mxu0 0.0
    %951 = vmatpush1.msra.mxu0 0.0
    %952 = vmatprep.subr.mxu0 0.0
    %953 = vmatpush1.msra.mxu0 0.0
    %954 = vmatprep.subr.mxu0 0.0
    %955 = vmatpush1.msra.mxu0 0.0
    %956 = vmatprep.mubr.f32.mxu0 0.0
    %957 = vmatmul.mubr.f32.gmra.mrb[0].mxu0 %v891
    %v958 = vpop.f32.mrb[0].mxu0
    %v959 = vadd.f32 0.0, %v958
    %v960 = vpop.f32.mrb[0].mxu0
    %961 = vdwg.mxu0
    %v962 = vadd.f32 %v805, %v959
    %v963 = vtanh.pop %v962
    %v964 = vsub.f32 1.0, %v890
    %v965 = vmul.f32 %v964, %v799
    %v966 = vmul.f32 %v890, %v963
    %v967 = vadd.f32 %v965, %v966
    %s968 = scalar_lea.vmem [#allocation11], 32
    %969 = vst [vmem:[%s968] sm:$0xff] %v967
    %s970 = scalar_lea.vmem [#allocation3], 120
    %v971 = vld [vmem:[%s970] sm:$0xff]
    %v972 = vld [vmem:[%s970 + $0x8] sm:$0xff]
    %v973 = vld [vmem:[%s970 + $0x10] sm:$0xff]
    %974 = vmatprep.subr.mxu0 %v84
    %975 = vmatpush1.msra.mxu0 %v83
    %976 = vmatprep.subr.mxu0 %v86
    %977 = vmatpush1.msra.mxu0 %v85
    %978 = vmatprep.subr.mxu0 %v88
    %979 = vmatpush1.msra.mxu0 %v87
    %980 = vmatprep.subr.mxu0 %v90
    %981 = vmatpush1.msra.mxu0 %v89
    %982 = vmatprep.subr.mxu0 %v92
    %983 = vmatpush1.msra.mxu0 %v91
    %984 = vmatprep.subr.mxu0 %v94
    %985 = vmatpush1.msra.mxu0 %v93
    %986 = vmatprep.subr.mxu0 %v96
    %987 = vmatpush1.msra.mxu0 %v95
    %988 = vmatprep.subr.mxu0 %v98
    %989 = vmatpush1.msra.mxu0 %v97
    %990 = vmatprep.subr.mxu0 %v100
    %991 = vmatpush1.msra.mxu0 %v99
    %992 = vmatprep.subr.mxu0 %v102
    %993 = vmatpush1.msra.mxu0 %v101
    %994 = vmatprep.subr.mxu0 %v104
    %995 = vmatpush1.msra.mxu0 %v103
    %996 = vmatprep.subr.mxu0 %v106
    %997 = vmatpush1.msra.mxu0 %v105
    %998 = vmatprep.subr.mxu0 %v108
    %999 = vmatpush1.msra.mxu0 %v107
    %1000 = vmatprep.subr.mxu0 %v110
    %1001 = vmatpush1.msra.mxu0 %v109
    %1002 = vmatprep.subr.mxu0 %v112
    %1003 = vmatpush1.msra.mxu0 %v111
    %1004 = vmatprep.subr.mxu0 %v114
    %1005 = vmatpush1.msra.mxu0 %v113
    %1006 = vmatprep.subr.mxu0 0.0
    %1007 = vmatpush1.msra.mxu0 0.0
    %1008 = vmatprep.subr.mxu0 0.0
    %1009 = vmatpush1.msra.mxu0 0.0
    %1010 = vmatprep.subr.mxu0 0.0
    %1011 = vmatpush1.msra.mxu0 0.0
    %1012 = vmatprep.subr.mxu0 0.0
    %1013 = vmatpush1.msra.mxu0 0.0
    %1014 = vmatprep.subr.mxu0 0.0
    %1015 = vmatpush1.msra.mxu0 0.0
    %1016 = vmatprep.subr.mxu0 0.0
    %1017 = vmatpush1.msra.mxu0 0.0
    %1018 = vmatprep.subr.mxu0 0.0
    %1019 = vmatpush1.msra.mxu0 0.0
    %1020 = vmatprep.subr.mxu0 0.0
    %1021 = vmatpush1.msra.mxu0 0.0
    %1022 = vmatprep.subr.mxu0 0.0
    %1023 = vmatpush1.msra.mxu0 0.0
    %1024 = vmatprep.subr.mxu0 0.0
    %1025 = vmatpush1.msra.mxu0 0.0
    %1026 = vmatprep.subr.mxu0 0.0
    %1027 = vmatpush1.msra.mxu0 0.0
    %1028 = vmatprep.subr.mxu0 0.0
    %1029 = vmatpush1.msra.mxu0 0.0
    %1030 = vmatprep.subr.mxu0 0.0
    %1031 = vmatpush1.msra.mxu0 0.0
    %1032 = vmatprep.subr.mxu0 0.0
    %1033 = vmatpush1.msra.mxu0 0.0
    %1034 = vmatprep.subr.mxu0 0.0
    %1035 = vmatpush1.msra.mxu0 0.0
    %1036 = vmatprep.subr.mxu0 0.0
    %1037 = vmatpush1.msra.mxu0 0.0
    %1038 = vmatprep.mubr.f32.mxu0 0.0
    %1039 = vmatmul.mubr.f32.gmra.mrb[0].mxu0 %v967
    %v1040 = vpop.f32.mrb[0].mxu0
    %v1041 = vadd.f32 0.0, %v1040
    %v1042 = vpop.f32.mrb[0].mxu0
    %v1043 = vadd.f32 0.0, %v1042
    %1044 = vdwg.mxu0
    %v1045 = vadd.f32 %v971, %v1041
    %v1046 = vxor.u32 %v1045, 2147483648
    %v1047 = vmul.f32 %v1046, 1.442695
    %v1048 = vpow.pop %v1047
    %v1049 = vadd.f32 %v1048, 1.0
    %v1050 = vrcp.pop %v1049
    %v1051 = vmul.f32 1.0, %v1050
    %v1052 = vadd.f32 %v972, %v1043
    %v1053 = vxor.u32 %v1052, 2147483648
    %v1054 = vmul.f32 %v1053, 1.442695
    %v1055 = vpow.pop %v1054
    %v1056 = vadd.f32 %v1055, 1.0
    %v1057 = vrcp.pop %v1056
    %v1058 = vmul.f32 1.0, %v1057
    %v1059 = vmul.f32 %v1051, %v967
    %1060 = vmatprep.subr.mxu0 0.0
    %1061 = vmatpush1.msra.mxu0 %v115
    %1062 = vmatprep.subr.mxu0 0.0
    %1063 = vmatpush1.msra.mxu0 %v116
    %1064 = vmatprep.subr.mxu0 0.0
    %1065 = vmatpush1.msra.mxu0 %v117
    %1066 = vmatprep.subr.mxu0 0.0
    %1067 = vmatpush1.msra.mxu0 %v118
    %1068 = vmatprep.subr.mxu0 0.0
    %1069 = vmatpush1.msra.mxu0 %v119
    %1070 = vmatprep.subr.mxu0 0.0
    %1071 = vmatpush1.msra.mxu0 %v120
    %1072 = vmatprep.subr.mxu0 0.0
    %1073 = vmatpush1.msra.mxu0 %v121
    %1074 = vmatprep.subr.mxu0 0.0
    %1075 = vmatpush1.msra.mxu0 %v122
    %1076 = vmatprep.subr.mxu0 0.0
    %1077 = vmatpush1.msra.mxu0 %v123
    %1078 = vmatprep.subr.mxu0 0.0
    %1079 = vmatpush1.msra.mxu0 %v124
    %1080 = vmatprep.subr.mxu0 0.0
    %1081 = vmatpush1.msra.mxu0 %v125
    %1082 = vmatprep.subr.mxu0 0.0
    %1083 = vmatpush1.msra.mxu0 %v126
    %1084 = vmatprep.subr.mxu0 0.0
    %1085 = vmatpush1.msra.mxu0 %v127
    %1086 = vmatprep.subr.mxu0 0.0
    %1087 = vmatpush1.msra.mxu0 %v128
    %1088 = vmatprep.subr.mxu0 0.0
    %1089 = vmatpush1.msra.mxu0 %v129
    %1090 = vmatprep.subr.mxu0 0.0
    %1091 = vmatpush1.msra.mxu0 %v130
    %1092 = vmatprep.subr.mxu0 0.0
    %1093 = vmatpush1.msra.mxu0 0.0
    %1094 = vmatprep.subr.mxu0 0.0
    %1095 = vmatpush1.msra.mxu0 0.0
    %1096 = vmatprep.subr.mxu0 0.0
    %1097 = vmatpush1.msra.mxu0 0.0
    %1098 = vmatprep.subr.mxu0 0.0
    %1099 = vmatpush1.msra.mxu0 0.0
    %1100 = vmatprep.subr.mxu0 0.0
    %1101 = vmatpush1.msra.mxu0 0.0
    %1102 = vmatprep.subr.mxu0 0.0
    %1103 = vmatpush1.msra.mxu0 0.0
    %1104 = vmatprep.subr.mxu0 0.0
    %1105 = vmatpush1.msra.mxu0 0.0
    %1106 = vmatprep.subr.mxu0 0.0
    %1107 = vmatpush1.msra.mxu0 0.0
    %1108 = vmatprep.subr.mxu0 0.0
    %1109 = vmatpush1.msra.mxu0 0.0
    %1110 = vmatprep.subr.mxu0 0.0
    %1111 = vmatpush1.msra.mxu0 0.0
    %1112 = vmatprep.subr.mxu0 0.0
    %1113 = vmatpush1.msra.mxu0 0.0
    %1114 = vmatprep.subr.mxu0 0.0
    %1115 = vmatpush1.msra.mxu0 0.0
    %1116 = vmatprep.subr.mxu0 0.0
    %1117 = vmatpush1.msra.mxu0 0.0
    %1118 = vmatprep.subr.mxu0 0.0
    %1119 = vmatpush1.msra.mxu0 0.0
    %1120 = vmatprep.subr.mxu0 0.0
    %1121 = vmatpush1.msra.mxu0 0.0
    %1122 = vmatprep.subr.mxu0 0.0
    %1123 = vmatpush1.msra.mxu0 0.0
    %1124 = vmatprep.mubr.f32.mxu0 0.0
    %1125 = vmatmul.mubr.f32.gmra.mrb[0].mxu0 %v1059
    %v1126 = vpop.f32.mrb[0].mxu0
    %v1127 = vadd.f32 0.0, %v1126
    %v1128 = vpop.f32.mrb[0].mxu0
    %1129 = vdwg.mxu0
    %v1130 = vadd.f32 %v973, %v1127
    %v1131 = vtanh.pop %v1130
    %v1132 = vsub.f32 1.0, %v1058
    %v1133 = vmul.f32 %v1132, %v967
    %v1134 = vmul.f32 %v1058, %v1131
    %v1135 = vadd.f32 %v1133, %v1134
    %s1136 = scalar_lea.vmem [#allocation11], 40
    %1137 = vst [vmem:[%s1136] sm:$0xff] %v1135
    %s1138 = scalar_lea.vmem [#allocation3], 144
    %v1139 = vld [vmem:[%s1138] sm:$0xff]
    %v1140 = vld [vmem:[%s1138 + $0x8] sm:$0xff]
    %v1141 = vld [vmem:[%s1138 + $0x10] sm:$0xff]
    %1142 = vmatprep.subr.mxu0 %v84
    %1143 = vmatpush1.msra.mxu0 %v83
    %1144 = vmatprep.subr.mxu0 %v86
    %1145 = vmatpush1.msra.mxu0 %v85
    %1146 = vmatprep.subr.mxu0 %v88
    %1147 = vmatpush1.msra.mxu0 %v87
    %1148 = vmatprep.subr.mxu0 %v90
    %1149 = vmatpush1.msra.mxu0 %v89
    %1150 = vmatprep.subr.mxu0 %v92
    %1151 = vmatpush1.msra.mxu0 %v91
    %1152 = vmatprep.subr.mxu0 %v94
    %1153 = vmatpush1.msra.mxu0 %v93
    %1154 = vmatprep.subr.mxu0 %v96
    %1155 = vmatpush1.msra.mxu0 %v95
    %1156 = vmatprep.subr.mxu0 %v98
    %1157 = vmatpush1.msra.mxu0 %v97
    %1158 = vmatprep.subr.mxu0 %v100
    %1159 = vmatpush1.msra.mxu0 %v99
    %1160 = vmatprep.subr.mxu0 %v102
    %1161 = vmatpush1.msra.mxu0 %v101
    %1162 = vmatprep.subr.mxu0 %v104
    %1163 = vmatpush1.msra.mxu0 %v103
    %1164 = vmatprep.subr.mxu0 %v106
    %1165 = vmatpush1.msra.mxu0 %v105
    %1166 = vmatprep.subr.mxu0 %v108
    %1167 = vmatpush1.msra.mxu0 %v107
    %1168 = vmatprep.subr.mxu0 %v110
    %1169 = vmatpush1.msra.mxu0 %v109
    %1170 = vmatprep.subr.mxu0 %v112
    %1171 = vmatpush1.msra.mxu0 %v111
    %1172 = vmatprep.subr.mxu0 %v114
    %1173 = vmatpush1.msra.mxu0 %v113
    %1174 = vmatprep.subr.mxu0 0.0
    %1175 = vmatpush1.msra.mxu0 0.0
    %1176 = vmatprep.subr.mxu0 0.0
    %1177 = vmatpush1.msra.mxu0 0.0
    %1178 = vmatprep.subr.mxu0 0.0
    %1179 = vmatpush1.msra.mxu0 0.0
    %1180 = vmatprep.subr.mxu0 0.0
    %1181 = vmatpush1.msra.mxu0 0.0
    %1182 = vmatprep.subr.mxu0 0.0
    %1183 = vmatpush1.msra.mxu0 0.0
    %1184 = vmatprep.subr.mxu0 0.0
    %1185 = vmatpush1.msra.mxu0 0.0
    %1186 = vmatprep.subr.mxu0 0.0
    %1187 = vmatpush1.msra.mxu0 0.0
    %1188 = vmatprep.subr.mxu0 0.0
    %1189 = vmatpush1.msra.mxu0 0.0
    %1190 = vmatprep.subr.mxu0 0.0
    %1191 = vmatpush1.msra.mxu0 0.0
    %1192 = vmatprep.subr.mxu0 0.0
    %1193 = vmatpush1.msra.mxu0 0.0
    %1194 = vmatprep.subr.mxu0 0.0
    %1195 = vmatpush1.msra.mxu0 0.0
    %1196 = vmatprep.subr.mxu0 0.0
    %1197 = vmatpush1.msra.mxu0 0.0
    %1198 = vmatprep.subr.mxu0 0.0
    %1199 = vmatpush1.msra.mxu0 0.0
    %1200 = vmatprep.subr.mxu0 0.0
    %1201 = vmatpush1.msra.mxu0 0.0
    %1202 = vmatprep.subr.mxu0 0.0
    %1203 = vmatpush1.msra.mxu0 0.0
    %1204 = vmatprep.subr.mxu0 0.0
    %1205 = vmatpush1.msra.mxu0 0.0
    %1206 = vmatprep.mubr.f32.mxu0 0.0
    %1207 = vmatmul.mubr.f32.gmra.mrb[0].mxu0 %v1135
    %v1208 = vpop.f32.mrb[0].mxu0
    %v1209 = vadd.f32 0.0, %v1208
    %v1210 = vpop.f32.mrb[0].mxu0
    %v1211 = vadd.f32 0.0, %v1210
    %1212 = vdwg.mxu0
    %v1213 = vadd.f32 %v1139, %v1209
    %v1214 = vxor.u32 %v1213, 2147483648
    %v1215 = vmul.f32 %v1214, 1.442695
    %v1216 = vpow.pop %v1215
    %v1217 = vadd.f32 %v1216, 1.0
    %v1218 = vrcp.pop %v1217
    %v1219 = vmul.f32 1.0, %v1218
    %v1220 = vadd.f32 %v1140, %v1211
    %v1221 = vxor.u32 %v1220, 2147483648
    %v1222 = vmul.f32 %v1221, 1.442695
    %v1223 = vpow.pop %v1222
    %v1224 = vadd.f32 %v1223, 1.0
    %v1225 = vrcp.pop %v1224
    %v1226 = vmul.f32 1.0, %v1225
    %v1227 = vmul.f32 %v1219, %v1135
    %1228 = vmatprep.subr.mxu0 0.0
    %1229 = vmatpush1.msra.mxu0 %v115
    %1230 = vmatprep.subr.mxu0 0.0
    %1231 = vmatpush1.msra.mxu0 %v116
    %1232 = vmatprep.subr.mxu0 0.0
    %1233 = vmatpush1.msra.mxu0 %v117
    %1234 = vmatprep.subr.mxu0 0.0
    %1235 = vmatpush1.msra.mxu0 %v118
    %1236 = vmatprep.subr.mxu0 0.0
    %1237 = vmatpush1.msra.mxu0 %v119
    %1238 = vmatprep.subr.mxu0 0.0
    %1239 = vmatpush1.msra.mxu0 %v120
    %1240 = vmatprep.subr.mxu0 0.0
    %1241 = vmatpush1.msra.mxu0 %v121
    %1242 = vmatprep.subr.mxu0 0.0
    %1243 = vmatpush1.msra.mxu0 %v122
    %1244 = vmatprep.subr.mxu0 0.0
    %1245 = vmatpush1.msra.mxu0 %v123
    %1246 = vmatprep.subr.mxu0 0.0
    %1247 = vmatpush1.msra.mxu0 %v124
    %1248 = vmatprep.subr.mxu0 0.0
    %1249 = vmatpush1.msra.mxu0 %v125
    %1250 = vmatprep.subr.mxu0 0.0
    %1251 = vmatpush1.msra.mxu0 %v126
    %1252 = vmatprep.subr.mxu0 0.0
    %1253 = vmatpush1.msra.mxu0 %v127
    %1254 = vmatprep.subr.mxu0 0.0
    %1255 = vmatpush1.msra.mxu0 %v128
    %1256 = vmatprep.subr.mxu0 0.0
    %1257 = vmatpush1.msra.mxu0 %v129
    %1258 = vmatprep.subr.mxu0 0.0
    %1259 = vmatpush1.msra.mxu0 %v130
    %1260 = vmatprep.subr.mxu0 0.0
    %1261 = vmatpush1.msra.mxu0 0.0
    %1262 = vmatprep.subr.mxu0 0.0
    %1263 = vmatpush1.msra.mxu0 0.0
    %1264 = vmatprep.subr.mxu0 0.0
    %1265 = vmatpush1.msra.mxu0 0.0
    %1266 = vmatprep.subr.mxu0 0.0
    %1267 = vmatpush1.msra.mxu0 0.0
    %1268 = vmatprep.subr.mxu0 0.0
    %1269 = vmatpush1.msra.mxu0 0.0
    %1270 = vmatprep.subr.mxu0 0.0
    %1271 = vmatpush1.msra.mxu0 0.0
    %1272 = vmatprep.subr.mxu0 0.0
    %1273 = vmatpush1.msra.mxu0 0.0
    %1274 = vmatprep.subr.mxu0 0.0
    %1275 = vmatpush1.msra.mxu0 0.0
    %1276 = vmatprep.subr.mxu0 0.0
    %1277 = vmatpush1.msra.mxu0 0.0
    %1278 = vmatprep.subr.mxu0 0.0
    %1279 = vmatpush1.msra.mxu0 0.0
    %1280 = vmatprep.subr.mxu0 0.0
    %1281 = vmatpush1.msra.mxu0 0.0
    %1282 = vmatprep.subr.mxu0 0.0
    %1283 = vmatpush1.msra.mxu0 0.0
    %1284 = vmatprep.subr.mxu0 0.0
    %1285 = vmatpush1.msra.mxu0 0.0
    %1286 = vmatprep.subr.mxu0 0.0
    %1287 = vmatpush1.msra.mxu0 0.0
    %1288 = vmatprep.subr.mxu0 0.0
    %1289 = vmatpush1.msra.mxu0 0.0
    %1290 = vmatprep.subr.mxu0 0.0
    %1291 = vmatpush1.msra.mxu0 0.0
    %1292 = vmatprep.mubr.f32.mxu0 0.0
    %1293 = vmatmul.mubr.f32.gmra.mrb[0].mxu0 %v1227
    %v1294 = vpop.f32.mrb[0].mxu0
    %v1295 = vadd.f32 0.0, %v1294
    %v1296 = vpop.f32.mrb[0].mxu0
    %1297 = vdwg.mxu0
    %v1298 = vadd.f32 %v1141, %v1295
    %v1299 = vtanh.pop %v1298
    %v1300 = vsub.f32 1.0, %v1226
    %v1301 = vmul.f32 %v1300, %v1135
    %v1302 = vmul.f32 %v1226, %v1299
    %v1303 = vadd.f32 %v1301, %v1302
    %s1304 = scalar_lea.vmem [#allocation11], 48
    %1305 = vst [vmem:[%s1304] sm:$0xff] %v1303
    %s1306 = scalar_lea.vmem [#allocation3], 168
    %v1307 = vld [vmem:[%s1306] sm:$0xff]
    %v1308 = vld [vmem:[%s1306 + $0x8] sm:$0xff]
    %v1309 = vld [vmem:[%s1306 + $0x10] sm:$0xff]
    %1310 = vmatprep.subr.mxu0 %v84
    %1311 = vmatpush1.msra.mxu0 %v83
    %1312 = vmatprep.subr.mxu0 %v86
    %1313 = vmatpush1.msra.mxu0 %v85
    %1314 = vmatprep.subr.mxu0 %v88
    %1315 = vmatpush1.msra.mxu0 %v87
    %1316 = vmatprep.subr.mxu0 %v90
    %1317 = vmatpush1.msra.mxu0 %v89
    %1318 = vmatprep.subr.mxu0 %v92
    %1319 = vmatpush1.msra.mxu0 %v91
    %1320 = vmatprep.subr.mxu0 %v94
    %1321 = vmatpush1.msra.mxu0 %v93
    %1322 = vmatprep.subr.mxu0 %v96
    %1323 = vmatpush1.msra.mxu0 %v95
    %1324 = vmatprep.subr.mxu0 %v98
    %1325 = vmatpush1.msra.mxu0 %v97
    %1326 = vmatprep.subr.mxu0 %v100
    %1327 = vmatpush1.msra.mxu0 %v99
    %1328 = vmatprep.subr.mxu0 %v102
    %1329 = vmatpush1.msra.mxu0 %v101
    %1330 = vmatprep.subr.mxu0 %v104
    %1331 = vmatpush1.msra.mxu0 %v103
    %1332 = vmatprep.subr.mxu0 %v106
    %1333 = vmatpush1.msra.mxu0 %v105
    %1334 = vmatprep.subr.mxu0 %v108
    %1335 = vmatpush1.msra.mxu0 %v107
    %1336 = vmatprep.subr.mxu0 %v110
    %1337 = vmatpush1.msra.mxu0 %v109
    %1338 = vmatprep.subr.mxu0 %v112
    %1339 = vmatpush1.msra.mxu0 %v111
    %1340 = vmatprep.subr.mxu0 %v114
    %1341 = vmatpush1.msra.mxu0 %v113
    %1342 = vmatprep.subr.mxu0 0.0
    %1343 = vmatpush1.msra.mxu0 0.0
    %1344 = vmatprep.subr.mxu0 0.0
    %1345 = vmatpush1.msra.mxu0 0.0
    %1346 = vmatprep.subr.mxu0 0.0
    %1347 = vmatpush1.msra.mxu0 0.0
    %1348 = vmatprep.subr.mxu0 0.0
    %1349 = vmatpush1.msra.mxu0 0.0
    %1350 = vmatprep.subr.mxu0 0.0
    %1351 = vmatpush1.msra.mxu0 0.0
    %1352 = vmatprep.subr.mxu0 0.0
    %1353 = vmatpush1.msra.mxu0 0.0
    %1354 = vmatprep.subr.mxu0 0.0
    %1355 = vmatpush1.msra.mxu0 0.0
    %1356 = vmatprep.subr.mxu0 0.0
    %1357 = vmatpush1.msra.mxu0 0.0
    %1358 = vmatprep.subr.mxu0 0.0
    %1359 = vmatpush1.msra.mxu0 0.0
    %1360 = vmatprep.subr.mxu0 0.0
    %1361 = vmatpush1.msra.mxu0 0.0
    %1362 = vmatprep.subr.mxu0 0.0
    %1363 = vmatpush1.msra.mxu0 0.0
    %1364 = vmatprep.subr.mxu0 0.0
    %1365 = vmatpush1.msra.mxu0 0.0
    %1366 = vmatprep.subr.mxu0 0.0
    %1367 = vmatpush1.msra.mxu0 0.0
    %1368 = vmatprep.subr.mxu0 0.0
    %1369 = vmatpush1.msra.mxu0 0.0
    %1370 = vmatprep.subr.mxu0 0.0
    %1371 = vmatpush1.msra.mxu0 0.0
    %1372 = vmatprep.subr.mxu0 0.0
    %1373 = vmatpush1.msra.mxu0 0.0
    %1374 = vmatprep.mubr.f32.mxu0 0.0
    %1375 = vmatmul.mubr.f32.gmra.mrb[0].mxu0 %v1303
    %v1376 = vpop.f32.mrb[0].mxu0
    %v1377 = vadd.f32 0.0, %v1376
    %v1378 = vpop.f32.mrb[0].mxu0
    %v1379 = vadd.f32 0.0, %v1378
    %1380 = vdwg.mxu0
    %v1381 = vadd.f32 %v1307, %v1377
    %v1382 = vxor.u32 %v1381, 2147483648
    %v1383 = vmul.f32 %v1382, 1.442695
    %v1384 = vpow.pop %v1383
    %v1385 = vadd.f32 %v1384, 1.0
    %v1386 = vrcp.pop %v1385
    %v1387 = vmul.f32 1.0, %v1386
    %v1388 = vadd.f32 %v1308, %v1379
    %v1389 = vxor.u32 %v1388, 2147483648
    %v1390 = vmul.f32 %v1389, 1.442695
    %v1391 = vpow.pop %v1390
    %v1392 = vadd.f32 %v1391, 1.0
    %v1393 = vrcp.pop %v1392
    %v1394 = vmul.f32 1.0, %v1393
    %v1395 = vmul.f32 %v1387, %v1303
    %1396 = vmatprep.subr.mxu0 0.0
    %1397 = vmatpush1.msra.mxu0 %v115
    %1398 = vmatprep.subr.mxu0 0.0
    %1399 = vmatpush1.msra.mxu0 %v116
    %1400 = vmatprep.subr.mxu0 0.0
    %1401 = vmatpush1.msra.mxu0 %v117
    %1402 = vmatprep.subr.mxu0 0.0
    %1403 = vmatpush1.msra.mxu0 %v118
    %1404 = vmatprep.subr.mxu0 0.0
    %1405 = vmatpush1.msra.mxu0 %v119
    %1406 = vmatprep.subr.mxu0 0.0
    %1407 = vmatpush1.msra.mxu0 %v120
    %1408 = vmatprep.subr.mxu0 0.0
    %1409 = vmatpush1.msra.mxu0 %v121
    %1410 = vmatprep.subr.mxu0 0.0
    %1411 = vmatpush1.msra.mxu0 %v122
    %1412 = vmatprep.subr.mxu0 0.0
    %1413 = vmatpush1.msra.mxu0 %v123
    %1414 = vmatprep.subr.mxu0 0.0
    %1415 = vmatpush1.msra.mxu0 %v124
    %1416 = vmatprep.subr.mxu0 0.0
    %1417 = vmatpush1.msra.mxu0 %v125
    %1418 = vmatprep.subr.mxu0 0.0
    %1419 = vmatpush1.msra.mxu0 %v126
    %1420 = vmatprep.subr.mxu0 0.0
    %1421 = vmatpush1.msra.mxu0 %v127
    %1422 = vmatprep.subr.mxu0 0.0
    %1423 = vmatpush1.msra.mxu0 %v128
    %1424 = vmatprep.subr.mxu0 0.0
    %1425 = vmatpush1.msra.mxu0 %v129
    %1426 = vmatprep.subr.mxu0 0.0
    %1427 = vmatpush1.msra.mxu0 %v130
    %1428 = vmatprep.subr.mxu0 0.0
    %1429 = vmatpush1.msra.mxu0 0.0
    %1430 = vmatprep.subr.mxu0 0.0
    %1431 = vmatpush1.msra.mxu0 0.0
    %1432 = vmatprep.subr.mxu0 0.0
    %1433 = vmatpush1.msra.mxu0 0.0
    %1434 = vmatprep.subr.mxu0 0.0
    %1435 = vmatpush1.msra.mxu0 0.0
    %1436 = vmatprep.subr.mxu0 0.0
    %1437 = vmatpush1.msra.mxu0 0.0
    %1438 = vmatprep.subr.mxu0 0.0
    %1439 = vmatpush1.msra.mxu0 0.0
    %1440 = vmatprep.subr.mxu0 0.0
    %1441 = vmatpush1.msra.mxu0 0.0
    %1442 = vmatprep.subr.mxu0 0.0
    %1443 = vmatpush1.msra.mxu0 0.0
    %1444 = vmatprep.subr.mxu0 0.0
    %1445 = vmatpush1.msra.mxu0 0.0
    %1446 = vmatprep.subr.mxu0 0.0
    %1447 = vmatpush1.msra.mxu0 0.0
    %1448 = vmatprep.subr.mxu0 0.0
    %1449 = vmatpush1.msra.mxu0 0.0
    %1450 = vmatprep.subr.mxu0 0.0
    %1451 = vmatpush1.msra.mxu0 0.0
    %1452 = vmatprep.subr.mxu0 0.0
    %1453 = vmatpush1.msra.mxu0 0.0
    %1454 = vmatprep.subr.mxu0 0.0
    %1455 = vmatpush1.msra.mxu0 0.0
    %1456 = vmatprep.subr.mxu0 0.0
    %1457 = vmatpush1.msra.mxu0 0.0
    %1458 = vmatprep.subr.mxu0 0.0
    %1459 = vmatpush1.msra.mxu0 0.0
    %1460 = vmatprep.mubr.f32.mxu0 0.0
    %1461 = vmatmul.mubr.f32.gmra.mrb[0].mxu0 %v1395
    %v1462 = vpop.f32.mrb[0].mxu0
    %v1463 = vadd.f32 0.0, %v1462
    %v1464 = vpop.f32.mrb[0].mxu0
    %1465 = vdwg.mxu0
    %v1466 = vadd.f32 %v1309, %v1463
    %v1467 = vtanh.pop %v1466
    %v1468 = vsub.f32 1.0, %v1394
    %v1469 = vmul.f32 %v1468, %v1303
    %v1470 = vmul.f32 %v1394, %v1467
    %v1471 = vadd.f32 %v1469, %v1470
    %s1472 = scalar_lea.vmem [#allocation11], 56
    %1473 = vst [vmem:[%s1472] sm:$0xff] %v1471
    %1474 = vst [vmem:[#allocation2] sm:$0xff] %v1471
    // Predicated region
    $region38: #{tpu_custom_call.1} parent=1 // pred_check
      _
    $region39: #{tpu_custom_call.1} parent=1 // pred_check_branch
      %1476 = sbr.rel (0) target = $region41
    $region40: #{tpu_custom_call.1} parent=1 // pred_region
      %s1478 = ssub.s32 1024, 1024
      %1479 = vsyncadd [#allocation5], %s1478
      %s1480 = sshll.u32 [#allocation11], 4
      %s1481 = int_to_ptr.vmem [resolvable:$true] %s1480
      %1486 = dma.vmem_to_hbm [thread:$0]  %s1481, 1024, %s4, [#allocation5], 128, 128, 8
    $region41: #{tpu_custom_call.1} parent=1 // pred_fallthru
      _
    // Predicated region
    $region42: #{tpu_custom_call.1} parent=1 // pred_check
      _
    $region43: #{tpu_custom_call.1} parent=1 // pred_check_branch
      %1488 = sbr.rel (0) target = $region45
    $region44: #{tpu_custom_call.1} parent=1 // pred_region
      %1489 = dma.done [#allocation5], 1024
    $region45: #{tpu_custom_call.1} parent=1 // pred_fallthru
      _
    %1490 = vsyncpa [#allocation4], 1
    %1491 = vsyncpa [#allocation7], 1
    %1492 = vsyncpa [#allocation10], 1
    %1493 = vsyncpa [#allocation5], 1

</llo_original>
